<compile_context>
chip_gen: v6e
topology: v6e:2x2x1
jax: 0.10.0
libtpu: 0.0.40
codegen_flags: <defaults>
</compile_context>

<pallas_src>
import functools

import jax
import jax.numpy as jnp
import numpy as np
from jax.experimental import pallas as pl
from jax.experimental.pallas import tpu as pltpu

ORDER = 3  # nn.Module __init__ hyper-parameter


def _round_down(v, m):
    return (v // m) * m


# --------------------------------------------------------------------------
# Resident-adj kernel: one (N, tile_f) output tile per grid step.
# --------------------------------------------------------------------------
def _invnet_kernel(alpha_ref, adj_ref, x_ref, o_ref, *, order, matmul_dtype):
    """out_tile = sum_{k=0..order} (alpha*adj)^k @ x_tile.

    alpha_ref: SMEM (1,) f32 scalar (scalar prefetch)
    adj_ref:   VMEM (N, N) in matmul_dtype, resident across the F grid
    x_ref:     VMEM (N, tile_f) f32 tile
    o_ref:     VMEM (N, tile_f) f32 output tile
    """
    alpha = alpha_ref[0]
    adj = adj_ref[...]            # already in MXU dtype; no per-step N^2 work

    z = x_ref[...]                # current power term, carried in f32
    acc = z                       # f32 accumulator; o_ref written once at end
    for _ in range(order):        # small static order -> unrolled
        # alpha folded onto the small operand's result (exact: matches
        # z = alpha * (adj @ z) of the PyTorch forward), O(N*tile_f) per power.
        z = alpha * jnp.dot(adj, z.astype(matmul_dtype),
                            preferred_element_type=jnp.float32)
        acc = acc + z
    o_ref[...] = acc.astype(o_ref.dtype)


# --------------------------------------------------------------------------
# Escape hatch for large N (adj does not fit VMEM-resident) — precompute
# B = I + sum_{k=1..order} (alpha*adj)^k with `order` dense XLA matmuls, then
# a single standard K-tiled Pallas matmul  out = B @ x.
# --------------------------------------------------------------------------
def _matmul_accum_kernel(b_ref, x_ref, o_ref, acc_ref):
    @pl.when(pl.program_id(2) == 0)
    def _():
        acc_ref[...] = jnp.zeros_like(acc_ref)
    acc_ref[...] += jnp.dot(b_ref[...], x_ref[...],
                            preferred_element_type=jnp.float32)
    o_ref[...] = acc_ref[...].astype(o_ref.dtype)


def _invnet_powersum(adj, x, alpha, *, order, matmul_dtype):
    N = adj.shape[0]
    F = x.shape[1]

    A = alpha * adj.astype(jnp.float32)
    P = jnp.eye(N, dtype=jnp.float32)
    B = jnp.eye(N, dtype=jnp.float32)
    for _ in range(order):          # order dense N^3 matmuls in plain XLA
        P = A @ P
        B = B + P

    itemsize = jnp.dtype(matmul_dtype).itemsize
    Bm = B.astype(matmul_dtype)
    xm = x.astype(matmul_dtype)

    tm = N if N <= 256 else 256
    tk = N if N <= 512 else 512
    tn = F if F <= 256 else 256

    # Pad the contraction dim with zeros so partial K blocks never feed garbage
    # into the MXU (M / N-out partial blocks are handled by masked stores).
    Kp = pl.cdiv(N, tk) * tk
    if Kp != N:
        Bm = jnp.pad(Bm, ((0, 0), (0, Kp - N)))
        xm = jnp.pad(xm, ((0, Kp - N), (0, 0)))

    grid = (pl.cdiv(N, tm), pl.cdiv(F, tn), Kp // tk)
    return pl.pallas_call(
        _matmul_accum_kernel,
        out_shape=jax.ShapeDtypeStruct((N, F), jnp.float32),
        grid_spec=pltpu.PrefetchScalarGridSpec(
            num_scalar_prefetch=0,
            grid=grid,
            in_specs=[pl.BlockSpec((tm, tk), lambda i, j, k: (i, k)),
                      pl.BlockSpec((tk, tn), lambda i, j, k: (k, j))],
            out_specs=pl.BlockSpec((tm, tn), lambda i, j, k: (i, j)),
            scratch_shapes=[pltpu.VMEM((tm, tn), jnp.float32)]),
        compiler_params=pltpu.CompilerParams(
            dimension_semantics=("parallel", "parallel", "arbitrary")),
        cost_estimate=pl.CostEstimate(
            flops=2 * N * Kp * F,
            transcendentals=0,
            bytes_accessed=itemsize * (N * Kp + Kp * F) + 4 * N * F),
    )(Bm, xm)


# --------------------------------------------------------------------------
# Public wrapper.
# --------------------------------------------------------------------------
def invnet_forward(adj, x, alpha, *, order=ORDER, tile_f=None,
                   matmul_dtype=jnp.bfloat16, strategy="auto"):
    """Pallas implementation of InvNet(order).forward(adj, x, alpha)."""
    if strategy not in ("auto", "resident", "powersum"):
        raise ValueError(f"unknown strategy {strategy!r}")

    N, N2 = adj.shape
    assert N == N2, "adj must be square"
    Nx, F = x.shape
    assert Nx == N, "adj/x dimension mismatch"

    x = x.astype(jnp.float32)
    alpha_arr = jnp.asarray([alpha], dtype=jnp.float32)
    mm_itemsize = jnp.dtype(matmul_dtype).itemsize

    # --- generation-aware VMEM / core info ---------------------------------
    try:
        vmem_cap = int(pltpu.get_tpu_info().vmem_capacity_bytes)
    except Exception:
        vmem_cap = 64 << 20                     # conservative (valid everywhere)
    num_tc = 2 if vmem_cap <= (64 << 20) else 1  # v7x: 64 MiB / TC, 2 TCs
    vmem_budget = vmem_cap - (8 << 20)           # headroom for Mosaic internals

    # --- feature tile selection ---------------------------------------------
    if tile_f is None:
        if num_tc > 1:
            # >= 2 grid steps per TensorCore so x/out DMA overlaps compute.
            tile_f = max(128, min(512, _round_down(pl.cdiv(F, 2 * num_tc), 128)))
        else:
            # single TC (v5e/v6e, 128 MiB VMEM): biggest tile, fewest steps.
            tile_f = min(F, 1024)
    tile_f = min(tile_f, F)
    if tile_f != F:
        assert tile_f % 128 == 0, "tile_f must be a multiple of 128 lanes"
        # Note: if tile_f does not divide F the trailing block is masked on
        # store (correct, but burns MXU cycles on padded columns).

    def vmem_need(tf):
        adj_vmem = N * N * mm_itemsize       # resident adj, single-buffered
        io_vmem = 2 * 2 * N * tf * 4         # x + out tiles, double-buffered
        tmp_vmem = 4 * N * tf * 4            # z / scaled z / acc temporaries
        return adj_vmem + io_vmem + tmp_vmem

    while vmem_need(tile_f) > vmem_budget and tile_f > 128:
        tile_f = max(128, _round_down(tile_f // 2, 128))
    need = vmem_need(tile_f)

    if strategy == "auto":
        # (Optionally one could also switch on FLOPs when F >~ 1.5*N; kept
        #  VMEM-driven so the resident path is the default for typical graphs.)
        strategy = "resident" if need <= vmem_budget else "powersum"
    if strategy == "powersum":
        return _invnet_powersum(adj, x, alpha, order=order,
                                matmul_dtype=matmul_dtype)
    if need > vmem_budget:
        raise ValueError("adj does not fit VMEM-resident on this TPU; "
                         "use strategy='powersum'")

    # --- resident-adj path ---------------------------------------------------
    adj_mm = adj.astype(matmul_dtype)        # cast ONCE in the wrapper
    grid = (pl.cdiv(F, tile_f),)
    vmem_limit = int(min(vmem_budget, max(32 << 20, need + (4 << 20))))

    cost = pl.CostEstimate(
        flops=2 * order * N * N * F,
        transcendentals=0,
        bytes_accessed=mm_itemsize * N * N + 4 * 2 * N * F,
    )
    kernel = functools.partial(_invnet_kernel, order=order,
                               matmul_dtype=matmul_dtype)

    def _call(adj_spec):
        grid_spec = pltpu.PrefetchScalarGridSpec(
            num_scalar_prefetch=1,                            # alpha -> SMEM
            grid=grid,
            in_specs=[
                adj_spec,                                     # adj, VMEM-resident
                pl.BlockSpec((N, tile_f), lambda f, a: (0, f)),   # x tile
            ],
            out_specs=pl.BlockSpec((N, tile_f), lambda f, a: (0, f)),
        )
        return pl.pallas_call(
            kernel,
            out_shape=jax.ShapeDtypeStruct((N, F), jnp.float32),
            grid_spec=grid_spec,
            compiler_params=pltpu.CompilerParams(
                dimension_semantics=("parallel",),            # megacore on v7x
                vmem_limit_bytes=vmem_limit,
            ),
            cost_estimate=cost,
        )(alpha_arr, adj_mm, x)

    try:
        # adj's block index is constant across the grid -> single-buffer it
        # (it is DMA'd exactly once per core; saves N^2*itemsize of VMEM).
        return _call(pl.BlockSpec((N, N), lambda f, a: (0, 0),
                                  pipeline_mode=pl.Buffered(1)))
    except Exception:
        # Older jax without pipeline_mode support: default double-buffering.
        return _call(pl.BlockSpec((N, N), lambda f, a: (0, 0)))


def invnet_reference(adj, x, alpha, order=ORDER):
    """Pure-JAX reference mirroring the PyTorch forward exactly."""
    z_stack = [x]
    z = x
    for _ in range(order):
        z = alpha * (adj @ z)
        z_stack.append(z)
    return jnp.stack(z_stack, 0).sum(0)


if __name__ == "__main__":
    key = jax.random.PRNGKey(0)
    k_adj, k_x = jax.random.split(key)

    # Small graph-like shapes: N nodes, F features (multiples of (8, 128)).
    N, F = 256, 512
    adj = jax.random.normal(k_adj, (N, N), dtype=jnp.float32) * 0.05
    x = jax.random.normal(k_x, (N, F), dtype=jnp.float32)
    alpha = 0.7

    ref = invnet_reference(adj, x, alpha)

    # 1) f32 MXU path (validation): matches the reference tightly.
    out_f32 = jax.block_until_ready(
        invnet_forward(adj, x, alpha, matmul_dtype=jnp.float32,
                       strategy="resident"))
    np.testing.assert_allclose(
        np.asarray(out_f32), np.asarray(ref), rtol=1e-4, atol=1e-4)

    # 2) default path: auto -> resident adj, bf16 MXU inputs, f32 accumulation.
    #    (bf16 rounding compounds through the `order` powers -> relaxed tol.)
    out_bf16 = jax.block_until_ready(invnet_forward(adj, x, alpha))
    np.testing.assert_allclose(
        np.asarray(out_bf16), np.asarray(ref), rtol=3e-2, atol=3e-2)

    # 3) powersum escape hatch: B = I + sum_k (alpha*adj)^k, then tiled B @ x.
    out_ps = jax.block_until_ready(
        invnet_forward(adj, x, alpha, strategy="powersum"))
    np.testing.assert_allclose(
        np.asarray(out_ps), np.asarray(ref), rtol=3e-2, atol=3e-2)

    print("KERNEL_OK")
</pallas_src>

<mosaic_0001>
module attributes {stable_mosaic.version = 11 : i64} {
  func.func @_invnet_kernel(%arg0: i32, %arg1: memref<1xf32, #tpu.memory_space<smem>>, %arg2: memref<256x256xf32, #tpu.memory_space<vmem>>, %arg3: memref<256x128xf32, #tpu.memory_space<vmem>>, %arg4: memref<256x128xf32, #tpu.memory_space<vmem>>) attributes {dimension_semantics = [#tpu.dimension_semantics<parallel>], iteration_bounds = array<i64: 4>, scalar_prefetch = 1 : i64, scratch_operands = 0 : i64, tpu.core_type = #tpu.core_type<tc>, window_params = [{pipeline_mode = #tpu.pipeline_mode<synchronous>, transform_indices = @transform_0, window_bounds = array<i64: 256, 256>}, {transform_indices = @transform_1, window_bounds = array<i64: 256, 128>}, {transform_indices = @transform_2, window_bounds = array<i64: 256, 128>}]} {
    %c0 = arith.constant 0 : index
    %0 = memref.load %arg1[%c0] : memref<1xf32, #tpu.memory_space<smem>>
    %c0_0 = arith.constant 0 : index
    %c0_1 = arith.constant 0 : index
    %1 = vector.load %arg2[%c0_0, %c0_1] : memref<256x256xf32, #tpu.memory_space<vmem>>, vector<256x256xf32>
    %c0_2 = arith.constant 0 : index
    %c0_3 = arith.constant 0 : index
    %2 = vector.load %arg3[%c0_2, %c0_3] : memref<256x128xf32, #tpu.memory_space<vmem>>, vector<256x128xf32>
    %cst = arith.constant dense<0.000000e+00> : vector<256x128xf32>
    %3 = tpu.matmul %1, %2, %cst {dimension_numbers = #tpu.dot_dimension_numbers<[1], [0], [0], [1], [0, 0, 1, 1], [], []>} : vector<256x256xf32>, vector<256x128xf32>, vector<256x128xf32> -> vector<256x128xf32>
    %4 = vector.broadcast %0 : f32 to vector<256x128xf32>
    %5 = arith.mulf %4, %3 : vector<256x128xf32>
    %6 = arith.addf %2, %5 : vector<256x128xf32>
    %cst_4 = arith.constant dense<0.000000e+00> : vector<256x128xf32>
    %7 = tpu.matmul %1, %5, %cst_4 {dimension_numbers = #tpu.dot_dimension_numbers<[1], [0], [0], [1], [0, 0, 1, 1], [], []>} : vector<256x256xf32>, vector<256x128xf32>, vector<256x128xf32> -> vector<256x128xf32>
    %8 = vector.broadcast %0 : f32 to vector<256x128xf32>
    %9 = arith.mulf %8, %7 : vector<256x128xf32>
    %10 = arith.addf %6, %9 : vector<256x128xf32>
    %cst_5 = arith.constant dense<0.000000e+00> : vector<256x128xf32>
    %11 = tpu.matmul %1, %9, %cst_5 {dimension_numbers = #tpu.dot_dimension_numbers<[1], [0], [0], [1], [0, 0, 1, 1], [], []>} : vector<256x256xf32>, vector<256x128xf32>, vector<256x128xf32> -> vector<256x128xf32>
    %12 = vector.broadcast %0 : f32 to vector<256x128xf32>
    %13 = arith.mulf %12, %11 : vector<256x128xf32>
    %14 = arith.addf %10, %13 : vector<256x128xf32>
    %c0_6 = arith.constant 0 : index
    %c0_7 = arith.constant 0 : index
    %15 = vector.load %arg4[%c0_6, %c0_7] : memref<256x128xf32, #tpu.memory_space<vmem>>, vector<256x128xf32>
    tpu.vector_store %arg4[%c0_6, %c0_7], %14 {strides = array<i32>} : memref<256x128xf32, #tpu.memory_space<vmem>>, vector<256x128xf32>,
    return
  }
  func.func @transform_0(%arg0: i32, %arg1: memref<1xf32, #tpu.memory_space<smem>>) -> (i32, i32) {
    %c0_i32 = arith.constant 0 : i32
    %c0_i32_0 = arith.constant 0 : i32
    %c0_i32_1 = arith.constant 0 : i32
    return %c0_i32, %c0_i32_0 : i32, i32
  }
  func.func @transform_1(%arg0: i32, %arg1: memref<1xf32, #tpu.memory_space<smem>>) -> (i32, i32) {
    %c0_i32 = arith.constant 0 : i32
    %c0_i32_0 = arith.constant 0 : i32
    return %c0_i32, %arg0 : i32, i32
  }
  func.func @transform_2(%arg0: i32, %arg1: memref<1xf32, #tpu.memory_space<smem>>) -> (i32, i32) {
    %c0_i32 = arith.constant 0 : i32
    %c0_i32_0 = arith.constant 0 : i32
    return %c0_i32, %arg0 : i32, i32
  }
}

module attributes {stable_mosaic.version = 11 : i64} {
  func.func @_invnet_kernel(%arg0: i32, %arg1: memref<1xf32, #tpu.memory_space<smem>>, %arg2: memref<256x256xf32, #tpu.memory_space<vmem>>, %arg3: memref<256x128xf32, #tpu.memory_space<vmem>>, %arg4: memref<256x128xf32, #tpu.memory_space<vmem>>) attributes {dimension_semantics = [#tpu.dimension_semantics<parallel>], iteration_bounds = array<i64: 4>, scalar_prefetch = 1 : i64, scratch_operands = 0 : i64, tpu.core_type = #tpu.core_type<tc>, window_params = [{pipeline_mode = #tpu.pipeline_mode<synchronous>, transform_indices = @transform_0, window_bounds = array<i64: 256, 256>}, {transform_indices = @transform_1, window_bounds = array<i64: 256, 128>}, {transform_indices = @transform_2, window_bounds = array<i64: 256, 128>}]} {
    %c0 = arith.constant 0 : index
    %0 = memref.load %arg1[%c0] : memref<1xf32, #tpu.memory_space<smem>>
    %c0_0 = arith.constant 0 : index
    %c0_1 = arith.constant 0 : index
    %1 = vector.load %arg2[%c0_0, %c0_1] : memref<256x256xf32, #tpu.memory_space<vmem>>, vector<256x256xf32>
    %c0_2 = arith.constant 0 : index
    %c0_3 = arith.constant 0 : index
    %2 = vector.load %arg3[%c0_2, %c0_3] : memref<256x128xf32, #tpu.memory_space<vmem>>, vector<256x128xf32>
    %cst = arith.constant dense<0.000000e+00> : vector<256x128xf32>
    %3 = tpu.matmul %1, %2, %cst {dimension_numbers = #tpu.dot_dimension_numbers<[1], [0], [0], [1], [0, 0, 1, 1], [], []>} : vector<256x256xf32>, vector<256x128xf32>, vector<256x128xf32> -> vector<256x128xf32>
    %4 = vector.broadcast %0 : f32 to vector<256x128xf32>
    %5 = arith.mulf %4, %3 : vector<256x128xf32>
    %6 = arith.addf %2, %5 : vector<256x128xf32>
    %cst_4 = arith.constant dense<0.000000e+00> : vector<256x128xf32>
    %7 = tpu.matmul %1, %5, %cst_4 {dimension_numbers = #tpu.dot_dimension_numbers<[1], [0], [0], [1], [0, 0, 1, 1], [], []>} : vector<256x256xf32>, vector<256x128xf32>, vector<256x128xf32> -> vector<256x128xf32>
    %8 = vector.broadcast %0 : f32 to vector<256x128xf32>
    %9 = arith.mulf %8, %7 : vector<256x128xf32>
    %10 = arith.addf %6, %9 : vector<256x128xf32>
    %cst_5 = arith.constant dense<0.000000e+00> : vector<256x128xf32>
    %11 = tpu.matmul %1, %9, %cst_5 {dimension_numbers = #tpu.dot_dimension_numbers<[1], [0], [0], [1], [0, 0, 1, 1], [], []>} : vector<256x256xf32>, vector<256x128xf32>, vector<256x128xf32> -> vector<256x128xf32>
    %12 = vector.broadcast %0 : f32 to vector<256x128xf32>
    %13 = arith.mulf %12, %11 : vector<256x128xf32>
    %14 = arith.addf %10, %13 : vector<256x128xf32>
    %c0_6 = arith.constant 0 : index
    %c0_7 = arith.constant 0 : index
    %15 = vector.load %arg4[%c0_6, %c0_7] : memref<256x128xf32, #tpu.memory_space<vmem>>, vector<256x128xf32>
    tpu.vector_store %arg4[%c0_6, %c0_7], %14 {strides = array<i32>} : memref<256x128xf32, #tpu.memory_space<vmem>>, vector<256x128xf32>,
    return
  }
  func.func @transform_0(%arg0: i32, %arg1: memref<1xf32, #tpu.memory_space<smem>>) -> (i32, i32) {
    %c0_i32 = arith.constant 0 : i32
    %c0_i32_0 = arith.constant 0 : i32
    %c0_i32_1 = arith.constant 0 : i32
    return %c0_i32, %c0_i32_0 : i32, i32
  }
  func.func @transform_1(%arg0: i32, %arg1: memref<1xf32, #tpu.memory_space<smem>>) -> (i32, i32) {
    %c0_i32 = arith.constant 0 : i32
    %c0_i32_0 = arith.constant 0 : i32
    return %c0_i32, %arg0 : i32, i32
  }
  func.func @transform_2(%arg0: i32, %arg1: memref<1xf32, #tpu.memory_space<smem>>) -> (i32, i32) {
    %c0_i32 = arith.constant 0 : i32
    %c0_i32_0 = arith.constant 0 : i32
    return %c0_i32, %arg0 : i32, i32
  }
}

</mosaic_0001>

<llo_original>
// kernel: tpu_custom_call.1
$region0: #{tpu_custom_call.1}
  #allocation0 [shape = 'u32[]', space=smem, size = 0x4, offset = 0x4, fixed_abs, tag = 'smem constant byte address 0x4 - core index']
  #allocation1 [shape = 'u32[144,128]{1,0:T(1,128)}', space=vmem, size = 0x12000, scoped, tag = 'internal scratch']
  #allocation2 [shape = 's32[1]{0}', space=sflag, size = 0x4, scoped, tag = 'scoped memory for tpu_custom_call.1']
  #allocation3 [shape = 'f32[1]{0:T(128)S(6)}', space=smem, size = 0x200, scoped, tag = 'prefetched SMEM operand 0']
  %s0 = inlined_call_operand.<no memory space> [shape: f32[1], index: 0, kind: input, shape index: {}]
  %s1 = inlined_call_operand.hbm [shape: f32[256,256], index: 1, kind: input, shape index: {}]
  %s2 = inlined_call_operand.hbm [shape: f32[256,512], index: 2, kind: input, shape index: {}]
  %s3 = inlined_call_operand.hbm [shape: f32[256,512], index: 3, kind: output, shape index: {}]
  %s4 = sld [smem:[#allocation0]]
  $region49: #{tpu_custom_call.1} parent=0
    _
  %s6 = ssub.s32 1, %s4
  %s7 = scalar_select 0, %s6, %s4
  %8 = sst [smem:[#allocation3]] %s0
  $region1: #{tpu_custom_call.1} parent=0
    #allocation4 [shape = 'u8[262144]{0}', space=vmem, size = 0x40000, scoped, tag = 'input window, operand 1, single buffered']
    #allocation5 [shape = 's32[2]{0}', space=sflag, size = 0x8, scoped, tag = 'scoped memory for tpu_custom_call.1']
    #allocation6 [shape = 's32[2]{0}', space=sflag, size = 0x8, scoped, tag = 'scoped memory for tpu_custom_call.1']
    #allocation7 [shape = 'u8[262144]{0}', space=vmem, size = 0x40000, scoped, tag = 'input window, operand 2']
    #allocation8 [shape = 's32[2]{0}', space=sflag, size = 0x8, scoped, tag = 'scoped memory for tpu_custom_call.1']
    #allocation9 [shape = 'u8[262144]{0}', space=vmem, size = 0x40000, scoped, tag = 'output window, operand 0']
    %9 = vsyncpa [#allocation5], 0
    %10 = vsyncpa [#allocation8], 0
    %s11 = scalar_lea.sflag [#allocation8], 1
    %12 = vsyncpa %s11, 0
    %13 = vsyncpa [#allocation6], 0
    %s14 = scalar_lea.sflag [#allocation6], 1
    %15 = vsyncpa %s14, 0
    loop: start=0, step=1, limit=6
    $region2: #{tpu_custom_call.1} parent=1 // loop_pre_header
      _
    $region3: #{tpu_custom_call.1} parent=1 // loop_header
      %s17 = sphi 0, %s21
      %p18 = scmp.ge.s32.totalorder %s17, 6
      %s25 = sphi 0, %s25
      %s27 = sphi 0, %s25
      %s28 = sphi 0, %s27
      %s42 = sphi 0, %s28
      %s48 = sphi 0, %s50
      %s51 = sphi 0, %s48
      %s52 = sphi 0, %s51
      %s68 = sphi 0, %s52
      %s74 = sphi 0, %s76
      %s77 = sphi 0, %s74
      %s78 = sphi 0, %s77
      %s94 = sphi 0, %s78
    $region4: #{tpu_custom_call.1} parent=1 // loop_header_branch
      %20 = sbr.rel (%p18) target = $region8
    $region5: #{tpu_custom_call.1} parent=1 // loop_body
      %s22 = ssub.s32 %s17, 1
      %s23 = ssub.s32 %s17, 2
      %s24 = sadd.s32 %s17, 1
      %s26 = sadd.s32 %s25, 1
      %p29 = scmp.eq.s32.totalorder %s17, 3
      %p30 = scmp.ne.s32.totalorder %s25, %s27
      %p31 = scmp.eq.s32.totalorder %s17, 0
      %p32 = por %p30, %p31
      %p33 = scmp.ne.s32.totalorder %s25, %s27
      %p34 = scmp.eq.s32.totalorder %s22, 3
      %p35 = por %p33, %p34
      %p36 = scmp.ne.s32.totalorder %s27, %s28
      %p37 = scmp.eq.s32.totalorder %s22, 0
      %p38 = por %p36, %p37
      %p39 = scmp.ne.s32.totalorder %s27, %s28
      %p40 = scmp.eq.s32.totalorder %s23, 3
      %p41 = por %p39, %p40
      %p43 = scmp.ne.s32.totalorder %s28, %s42
      %p44 = scmp.eq.s32.totalorder %s23, 0
      %p45 = por %p43, %p44
      %s46 = ssub.s32 %s17, %s24
      %p47 = scmp.eq.s32.totalorder %s46, 0
      %s49 = sadd.s32 %s48, 1
      %s50 = scalar_select %p47, %s48, %s49
      %p53 = pneg %p47
      %p54 = scmp.eq.s32.totalorder %s17, 3
      %p55 = por %p53, %p54
      %p56 = scmp.ne.s32.totalorder %s48, %s51
      %p57 = scmp.eq.s32.totalorder %s17, 0
      %p58 = por %p56, %p57
      %p59 = scmp.ne.s32.totalorder %s48, %s51
      %p60 = scmp.eq.s32.totalorder %s22, 3
      %p61 = por %p59, %p60
      %p62 = scmp.ne.s32.totalorder %s51, %s52
      %p63 = scmp.eq.s32.totalorder %s22, 0
      %p64 = por %p62, %p63
      %p65 = scmp.ne.s32.totalorder %s51, %s52
      %p66 = scmp.eq.s32.totalorder %s23, 3
      %p67 = por %p65, %p66
      %p69 = scmp.ne.s32.totalorder %s52, %s68
      %p70 = scmp.eq.s32.totalorder %s23, 0
      %p71 = por %p69, %p70
      %s72 = ssub.s32 %s17, %s24
      %p73 = scmp.eq.s32.totalorder %s72, 0
      %s75 = sadd.s32 %s74, 1
      %s76 = scalar_select %p73, %s74, %s75
      %p79 = pneg %p73
      %p80 = scmp.eq.s32.totalorder %s17, 3
      %p81 = por %p79, %p80
      %p82 = scmp.ne.s32.totalorder %s74, %s77
      %p83 = scmp.eq.s32.totalorder %s17, 0
      %p84 = por %p82, %p83
      %p85 = scmp.ne.s32.totalorder %s74, %s77
      %p86 = scmp.eq.s32.totalorder %s22, 3
      %p87 = por %p85, %p86
      %p88 = scmp.ne.s32.totalorder %s77, %s78
      %p89 = scmp.eq.s32.totalorder %s22, 0
      %p90 = por %p88, %p89
      %p91 = scmp.ne.s32.totalorder %s77, %s78
      %p92 = scmp.eq.s32.totalorder %s23, 3
      %p93 = por %p91, %p92
      %p95 = scmp.ne.s32.totalorder %s78, %s94
      %p96 = scmp.eq.s32.totalorder %s23, 0
      %p97 = por %p95, %p96
      %p98 = scmp.le.s32.totalorder 1, %s17
      %p99 = scmp.lt.s32.totalorder %s17, 5
      %p100 = pnand %p98, %p99
      %p101 = pneg %p100
      // Predicated region
      $region9: #{tpu_custom_call.1} parent=5 // pred_check
        _
      $region10: #{tpu_custom_call.1} parent=5 // pred_check_branch
        %103 = sbr.rel (%p100) target = $region12
      $region11: #{tpu_custom_call.1} parent=5 // pred_region
        %s104 = ssub.s32 %s17, 1
        // Predicated region
        $region13: #{tpu_custom_call.1} parent=11 // pred_check
          %p105 = pneg %p38
        $region14: #{tpu_custom_call.1} parent=11 // pred_check_branch
          %107 = sbr.rel (%p105) target = $region16
        $region15: #{tpu_custom_call.1} parent=11 // pred_region
          %s109 = ssub.s32 8192, 8192
          %110 = vsyncadd [#allocation5], %s109
          %s111 = sshll.u32 [#allocation4], 4
          %s112 = int_to_ptr.vmem [resolvable:$true] %s111
          %117 = dma.hbm_to_vmem [thread:$0]  %s1, 8192, %s112, [#allocation5], 256, 256, 16
        $region16: #{tpu_custom_call.1} parent=11 // pred_fallthru
          _
      $region12: #{tpu_custom_call.1} parent=5 // pred_fallthru
        _
      %p118 = scmp.lt.s32.totalorder %s17, 4
      // Predicated region
      $region17: #{tpu_custom_call.1} parent=5 // pred_check
        %p119 = pneg %p118
      $region18: #{tpu_custom_call.1} parent=5 // pred_check_branch
        %121 = sbr.rel (%p119) target = $region20
      $region19: #{tpu_custom_call.1} parent=5 // pred_region
        // Predicated region
        $region21: #{tpu_custom_call.1} parent=19 // pred_check
          %p122 = pneg %p58
        $region22: #{tpu_custom_call.1} parent=19 // pred_check_branch
          %124 = sbr.rel (%p122) target = $region24
        $region23: #{tpu_custom_call.1} parent=19 // pred_region
          %s125 = sand.u32 %s48, 1
          %s126 = scalar_lea.sflag [#allocation8], %s125
          %s127 = sand.u32 %s48, 1
          %s128 = smul.addr %s127, 256
          %s129 = scalar_lea.vmem [#allocation7], %s128
          %s131 = ssub.s32 4096, 4096
          %132 = vsyncadd %s126, %s131
          %s133 = smul.addr %s17, 128
          %s134 = scalar_lea.hbm %s2, %s133
          %s135 = sshll.u32 %s129, 4
          %s136 = int_to_ptr.vmem [resolvable:$true] %s135
          %141 = dma.hbm_to_vmem [thread:$0]  %s134, 4096, %s136, %s126, 512, 128, 8
        $region24: #{tpu_custom_call.1} parent=19 // pred_fallthru
          _
      $region20: #{tpu_custom_call.1} parent=5 // pred_fallthru
        _
      %p142 = scmp.le.s32.totalorder 1, %s17
      %p143 = scmp.lt.s32.totalorder %s17, 5
      %p144 = pnand %p142, %p143
      %p145 = pneg %p144
      // Predicated region
      $region25: #{tpu_custom_call.1} parent=5 // pred_check
        _
      $region26: #{tpu_custom_call.1} parent=5 // pred_check_branch
        %147 = sbr.rel (%p144) target = $region28
      $region27: #{tpu_custom_call.1} parent=5 // pred_region
        %s148 = ssub.s32 %s17, 1
        // Predicated region
        $region29: #{tpu_custom_call.1} parent=27 // pred_check
          %p149 = pneg %p38
        $region30: #{tpu_custom_call.1} parent=27 // pred_check_branch
          %151 = sbr.rel (%p149) target = $region32
        $region31: #{tpu_custom_call.1} parent=27 // pred_region
          %152 = dma.done [#allocation5], 8192
        $region32: #{tpu_custom_call.1} parent=27 // pred_fallthru
          _
        %s153 = sand.u32 %s51, 1
        %s154 = scalar_lea.sflag [#allocation8], %s153
        %s155 = sand.u32 %s51, 1
        %s156 = smul.addr %s155, 256
        %s157 = scalar_lea.vmem [#allocation7], %s156
        // Predicated region
        $region33: #{tpu_custom_call.1} parent=27 // pred_check
          %p158 = pneg %p64
        $region34: #{tpu_custom_call.1} parent=27 // pred_check_branch
          %160 = sbr.rel (%p158) target = $region36
        $region35: #{tpu_custom_call.1} parent=27 // pred_region
          %161 = dma.done %s154, 4096
        $region36: #{tpu_custom_call.1} parent=27 // pred_fallthru
          _
        %p162 = pneg %p38
        %p163 = pneg %p35
        %s164 = sand.u32 %s51, 1
        %s165 = scalar_lea.sflag [#allocation8], %s164
        %s166 = sand.u32 %s51, 1
        %s167 = smul.addr %s166, 256
        %s168 = scalar_lea.vmem [#allocation7], %s167
        %p169 = pneg %p64
        %p170 = pneg %p61
        %p171 = pneg %p90
        %p172 = pneg %p87
        %s173 = sand.u32 %s77, 1
        %s174 = scalar_lea.sflag [#allocation6], %s173
        %s175 = sand.u32 %s77, 1
        %s176 = smul.addr %s175, 256
        %s177 = scalar_lea.vmem [#allocation9], %s176
        %s178 = sld [smem:[#allocation3]]
        %v179 = vld [vmem:[#allocation4] sm:$0xff]
        %v180 = vld [vmem:[#allocation4 + $0x8] sm:$0xff]
        %v181 = vld [vmem:[#allocation4 + $0x10] sm:$0xff]
        %v182 = vld [vmem:[#allocation4 + $0x18] sm:$0xff]
        %v183 = vld [vmem:[#allocation4 + $0x20] sm:$0xff]
        %v184 = vld [vmem:[#allocation4 + $0x28] sm:$0xff]
        %v185 = vld [vmem:[#allocation4 + $0x30] sm:$0xff]
        %v186 = vld [vmem:[#allocation4 + $0x38] sm:$0xff]
        %v187 = vld [vmem:[#allocation4 + $0x40] sm:$0xff]
        %v188 = vld [vmem:[#allocation4 + $0x48] sm:$0xff]
        %v189 = vld [vmem:[#allocation4 + $0x50] sm:$0xff]
        %v190 = vld [vmem:[#allocation4 + $0x58] sm:$0xff]
        %v191 = vld [vmem:[#allocation4 + $0x60] sm:$0xff]
        %v192 = vld [vmem:[#allocation4 + $0x68] sm:$0xff]
        %v193 = vld [vmem:[#allocation4 + $0x70] sm:$0xff]
        %v194 = vld [vmem:[#allocation4 + $0x78] sm:$0xff]
        %v195 = vld [vmem:[#allocation4 + $0x80] sm:$0xff]
        %v196 = vld [vmem:[#allocation4 + $0x88] sm:$0xff]
        %v197 = vld [vmem:[#allocation4 + $0x90] sm:$0xff]
        %v198 = vld [vmem:[#allocation4 + $0x98] sm:$0xff]
        %v199 = vld [vmem:[#allocation4 + $0xa0] sm:$0xff]
        %v200 = vld [vmem:[#allocation4 + $0xa8] sm:$0xff]
        %v201 = vld [vmem:[#allocation4 + $0xb0] sm:$0xff]
        %v202 = vld [vmem:[#allocation4 + $0xb8] sm:$0xff]
        %v203 = vld [vmem:[#allocation4 + $0xc0] sm:$0xff]
        %v204 = vld [vmem:[#allocation4 + $0xc8] sm:$0xff]
        %v205 = vld [vmem:[#allocation4 + $0xd0] sm:$0xff]
        %v206 = vld [vmem:[#allocation4 + $0xd8] sm:$0xff]
        %v207 = vld [vmem:[#allocation4 + $0xe0] sm:$0xff]
        %v208 = vld [vmem:[#allocation4 + $0xe8] sm:$0xff]
        %v209 = vld [vmem:[#allocation4 + $0xf0] sm:$0xff]
        %v210 = vld [vmem:[#allocation4 + $0xf8] sm:$0xff]
        %v211 = vld [vmem:[#allocation4 + $0x100] sm:$0xff]
        %v212 = vld [vmem:[#allocation4 + $0x108] sm:$0xff]
        %v213 = vld [vmem:[#allocation4 + $0x110] sm:$0xff]
        %v214 = vld [vmem:[#allocation4 + $0x118] sm:$0xff]
        %v215 = vld [vmem:[#allocation4 + $0x120] sm:$0xff]
        %v216 = vld [vmem:[#allocation4 + $0x128] sm:$0xff]
        %v217 = vld [vmem:[#allocation4 + $0x130] sm:$0xff]
        %v218 = vld [vmem:[#allocation4 + $0x138] sm:$0xff]
        %v219 = vld [vmem:[#allocation4 + $0x140] sm:$0xff]
        %v220 = vld [vmem:[#allocation4 + $0x148] sm:$0xff]
        %v221 = vld [vmem:[#allocation4 + $0x150] sm:$0xff]
        %v222 = vld [vmem:[#allocation4 + $0x158] sm:$0xff]
        %v223 = vld [vmem:[#allocation4 + $0x160] sm:$0xff]
        %v224 = vld [vmem:[#allocation4 + $0x168] sm:$0xff]
        %v225 = vld [vmem:[#allocation4 + $0x170] sm:$0xff]
        %v226 = vld [vmem:[#allocation4 + $0x178] sm:$0xff]
        %v227 = vld [vmem:[#allocation4 + $0x180] sm:$0xff]
        %v228 = vld [vmem:[#allocation4 + $0x188] sm:$0xff]
        %v229 = vld [vmem:[#allocation4 + $0x190] sm:$0xff]
        %v230 = vld [vmem:[#allocation4 + $0x198] sm:$0xff]
        %v231 = vld [vmem:[#allocation4 + $0x1a0] sm:$0xff]
        %v232 = vld [vmem:[#allocation4 + $0x1a8] sm:$0xff]
        %v233 = vld [vmem:[#allocation4 + $0x1b0] sm:$0xff]
        %v234 = vld [vmem:[#allocation4 + $0x1b8] sm:$0xff]
        %v235 = vld [vmem:[#allocation4 + $0x1c0] sm:$0xff]
        %v236 = vld [vmem:[#allocation4 + $0x1c8] sm:$0xff]
        %v237 = vld [vmem:[#allocation4 + $0x1d0] sm:$0xff]
        %v238 = vld [vmem:[#allocation4 + $0x1d8] sm:$0xff]
        %v239 = vld [vmem:[#allocation4 + $0x1e0] sm:$0xff]
        %v240 = vld [vmem:[#allocation4 + $0x1e8] sm:$0xff]
        %v241 = vld [vmem:[#allocation4 + $0x1f0] sm:$0xff]
        %v242 = vld [vmem:[#allocation4 + $0x1f8] sm:$0xff]
        %v243 = vld [vmem:[%s157] sm:$0xff]
        %v244 = vld [vmem:[%s157 + $0x8] sm:$0xff]
        %v245 = vld [vmem:[%s157 + $0x10] sm:$0xff]
        %v246 = vld [vmem:[%s157 + $0x18] sm:$0xff]
        %v247 = vld [vmem:[%s157 + $0x20] sm:$0xff]
        %v248 = vld [vmem:[%s157 + $0x28] sm:$0xff]
        %v249 = vld [vmem:[%s157 + $0x30] sm:$0xff]
        %v250 = vld [vmem:[%s157 + $0x38] sm:$0xff]
        %v251 = vld [vmem:[%s157 + $0x40] sm:$0xff]
        %v252 = vld [vmem:[%s157 + $0x48] sm:$0xff]
        %v253 = vld [vmem:[%s157 + $0x50] sm:$0xff]
        %v254 = vld [vmem:[%s157 + $0x58] sm:$0xff]
        %v255 = vld [vmem:[%s157 + $0x60] sm:$0xff]
        %v256 = vld [vmem:[%s157 + $0x68] sm:$0xff]
        %v257 = vld [vmem:[%s157 + $0x70] sm:$0xff]
        %v258 = vld [vmem:[%s157 + $0x78] sm:$0xff]
        %v259 = vld [vmem:[%s157 + $0x80] sm:$0xff]
        %v260 = vld [vmem:[%s157 + $0x88] sm:$0xff]
        %v261 = vld [vmem:[%s157 + $0x90] sm:$0xff]
        %v262 = vld [vmem:[%s157 + $0x98] sm:$0xff]
        %v263 = vld [vmem:[%s157 + $0xa0] sm:$0xff]
        %v264 = vld [vmem:[%s157 + $0xa8] sm:$0xff]
        %v265 = vld [vmem:[%s157 + $0xb0] sm:$0xff]
        %v266 = vld [vmem:[%s157 + $0xb8] sm:$0xff]
        %v267 = vld [vmem:[%s157 + $0xc0] sm:$0xff]
        %v268 = vld [vmem:[%s157 + $0xc8] sm:$0xff]
        %v269 = vld [vmem:[%s157 + $0xd0] sm:$0xff]
        %v270 = vld [vmem:[%s157 + $0xd8] sm:$0xff]
        %v271 = vld [vmem:[%s157 + $0xe0] sm:$0xff]
        %v272 = vld [vmem:[%s157 + $0xe8] sm:$0xff]
        %v273 = vld [vmem:[%s157 + $0xf0] sm:$0xff]
        %v274 = vld [vmem:[%s157 + $0xf8] sm:$0xff]
        %275 = vmatprep.subr.mxu0 0.0
        %276 = vmatpush1.msra.mxu0 %v258
        %277 = vmatprep.subr.mxu0 0.0
        %278 = vmatpush1.msra.mxu0 %v257
        %279 = vmatprep.subr.mxu0 0.0
        %280 = vmatpush1.msra.mxu0 %v256
        %281 = vmatprep.subr.mxu0 0.0
        %282 = vmatpush1.msra.mxu0 %v255
        %283 = vmatprep.subr.mxu0 0.0
        %284 = vmatpush1.msra.mxu0 %v254
        %285 = vmatprep.subr.mxu0 0.0
        %286 = vmatpush1.msra.mxu0 %v253
        %287 = vmatprep.subr.mxu0 0.0
        %288 = vmatpush1.msra.mxu0 %v252
        %289 = vmatprep.subr.mxu0 0.0
        %290 = vmatpush1.msra.mxu0 %v251
        %291 = vmatprep.subr.mxu0 0.0
        %292 = vmatpush1.msra.mxu0 %v250
        %293 = vmatprep.subr.mxu0 0.0
        %294 = vmatpush1.msra.mxu0 %v249
        %295 = vmatprep.subr.mxu0 0.0
        %296 = vmatpush1.msra.mxu0 %v248
        %297 = vmatprep.subr.mxu0 0.0
        %298 = vmatpush1.msra.mxu0 %v247
        %299 = vmatprep.subr.mxu0 0.0
        %300 = vmatpush1.msra.mxu0 %v246
        %301 = vmatprep.subr.mxu0 0.0
        %302 = vmatpush1.msra.mxu0 %v245
        %303 = vmatprep.subr.mxu0 0.0
        %304 = vmatpush1.msra.mxu0 %v244
        %305 = vmatprep.subr.mxu0 0.0
        %306 = vmatpush1.msra.mxu0 %v243
        %307 = vmatprep.subr.mxu0 0.0
        %308 = vmatpush2.msra.mxu0 %v274
        %309 = vmatprep.subr.mxu0 0.0
        %310 = vmatpush2.msra.mxu0 %v273
        %311 = vmatprep.subr.mxu0 0.0
        %312 = vmatpush2.msra.mxu0 %v272
        %313 = vmatprep.subr.mxu0 0.0
        %314 = vmatpush2.msra.mxu0 %v271
        %315 = vmatprep.subr.mxu0 0.0
        %316 = vmatpush2.msra.mxu0 %v270
        %317 = vmatprep.subr.mxu0 0.0
        %318 = vmatpush2.msra.mxu0 %v269
        %319 = vmatprep.subr.mxu0 0.0
        %320 = vmatpush2.msra.mxu0 %v268
        %321 = vmatprep.subr.mxu0 0.0
        %322 = vmatpush2.msra.mxu0 %v267
        %323 = vmatprep.subr.mxu0 0.0
        %324 = vmatpush2.msra.mxu0 %v266
        %325 = vmatprep.subr.mxu0 0.0
        %326 = vmatpush2.msra.mxu0 %v265
        %327 = vmatprep.subr.mxu0 0.0
        %328 = vmatpush2.msra.mxu0 %v264
        %329 = vmatprep.subr.mxu0 0.0
        %330 = vmatpush2.msra.mxu0 %v263
        %331 = vmatprep.subr.mxu0 0.0
        %332 = vmatpush2.msra.mxu0 %v262
        %333 = vmatprep.subr.mxu0 0.0
        %334 = vmatpush2.msra.mxu0 %v261
        %335 = vmatprep.subr.mxu0 0.0
        %336 = vmatpush2.msra.mxu0 %v260
        %337 = vmatprep.subr.mxu0 0.0
        %338 = vmatpush2.msra.mxu0 %v259
        %339 = vmatprep.mubr.f32.mxu0 %v180
        %340 = vmatmul.mubr.f32.gmra.mxu0 %v179
        %v341 = vpop.f32.mrf.mxu0
        %v342 = vadd.f32 0.0, %v341
        %v343 = vpop.f32.mrf.mxu0
        %344 = vmatprep.mubr.f32.mxu0 %v182
        %345 = vmatmul.mubr.f32.gmra.mxu0 %v181
        %v346 = vpop.f32.mrf.mxu0
        %v347 = vadd.f32 0.0, %v346
        %v348 = vpop.f32.mrf.mxu0
        %349 = vmatprep.mubr.f32.mxu0 %v184
        %350 = vmatmul.mubr.f32.gmra.mxu0 %v183
        %v351 = vpop.f32.mrf.mxu0
        %v352 = vadd.f32 0.0, %v351
        %v353 = vpop.f32.mrf.mxu0
        %354 = vmatprep.mubr.f32.mxu0 %v186
        %355 = vmatmul.mubr.f32.gmra.mxu0 %v185
        %v356 = vpop.f32.mrf.mxu0
        %v357 = vadd.f32 0.0, %v356
        %v358 = vpop.f32.mrf.mxu0
        %359 = vmatprep.mubr.f32.mxu0 %v188
        %360 = vmatmul.mubr.f32.gmra.mxu0 %v187
        %v361 = vpop.f32.mrf.mxu0
        %v362 = vadd.f32 0.0, %v361
        %v363 = vpop.f32.mrf.mxu0
        %364 = vmatprep.mubr.f32.mxu0 %v190
        %365 = vmatmul.mubr.f32.gmra.mxu0 %v189
        %v366 = vpop.f32.mrf.mxu0
        %v367 = vadd.f32 0.0, %v366
        %v368 = vpop.f32.mrf.mxu0
        %369 = vmatprep.mubr.f32.mxu0 %v192
        %370 = vmatmul.mubr.f32.gmra.mxu0 %v191
        %v371 = vpop.f32.mrf.mxu0
        %v372 = vadd.f32 0.0, %v371
        %v373 = vpop.f32.mrf.mxu0
        %374 = vmatprep.mubr.f32.mxu0 %v194
        %375 = vmatmul.mubr.f32.gmra.mxu0 %v193
        %v376 = vpop.f32.mrf.mxu0
        %v377 = vadd.f32 0.0, %v376
        %v378 = vpop.f32.mrf.mxu0
        %379 = vmatprep.mubr.f32.mxu0 %v196
        %380 = vmatmul.mubr.f32.gmra.mxu0 %v195
        %v381 = vpop.f32.mrf.mxu0
        %v382 = vadd.f32 0.0, %v381
        %v383 = vpop.f32.mrf.mxu0
        %384 = vmatprep.mubr.f32.mxu0 %v198
        %385 = vmatmul.mubr.f32.gmra.mxu0 %v197
        %v386 = vpop.f32.mrf.mxu0
        %v387 = vadd.f32 0.0, %v386
        %v388 = vpop.f32.mrf.mxu0
        %389 = vmatprep.mubr.f32.mxu0 %v200
        %390 = vmatmul.mubr.f32.gmra.mxu0 %v199
        %v391 = vpop.f32.mrf.mxu0
        %v392 = vadd.f32 0.0, %v391
        %v393 = vpop.f32.mrf.mxu0
        %394 = vmatprep.mubr.f32.mxu0 %v202
        %395 = vmatmul.mubr.f32.gmra.mxu0 %v201
        %v396 = vpop.f32.mrf.mxu0
        %v397 = vadd.f32 0.0, %v396
        %v398 = vpop.f32.mrf.mxu0
        %399 = vmatprep.mubr.f32.mxu0 %v204
        %400 = vmatmul.mubr.f32.gmra.mxu0 %v203
        %v401 = vpop.f32.mrf.mxu0
        %v402 = vadd.f32 0.0, %v401
        %v403 = vpop.f32.mrf.mxu0
        %404 = vmatprep.mubr.f32.mxu0 %v206
        %405 = vmatmul.mubr.f32.gmra.mxu0 %v205
        %v406 = vpop.f32.mrf.mxu0
        %v407 = vadd.f32 0.0, %v406
        %v408 = vpop.f32.mrf.mxu0
        %409 = vmatprep.mubr.f32.mxu0 %v208
        %410 = vmatmul.mubr.f32.gmra.mxu0 %v207
        %v411 = vpop.f32.mrf.mxu0
        %v412 = vadd.f32 0.0, %v411
        %v413 = vpop.f32.mrf.mxu0
        %414 = vmatprep.mubr.f32.mxu0 %v210
        %415 = vmatmul.mubr.f32.gmra.mxu0 %v209
        %v416 = vpop.f32.mrf.mxu0
        %v417 = vadd.f32 0.0, %v416
        %v418 = vpop.f32.mrf.mxu0
        %419 = vmatprep.mubr.f32.mxu0 %v212
        %420 = vmatmul.mubr.f32.gmra.mxu0 %v211
        %v421 = vpop.f32.mrf.mxu0
        %v422 = vadd.f32 0.0, %v421
        %v423 = vpop.f32.mrf.mxu0
        %424 = vmatprep.mubr.f32.mxu0 %v214
        %425 = vmatmul.mubr.f32.gmra.mxu0 %v213
        %v426 = vpop.f32.mrf.mxu0
        %v427 = vadd.f32 0.0, %v426
        %v428 = vpop.f32.mrf.mxu0
        %429 = vmatprep.mubr.f32.mxu0 %v216
        %430 = vmatmul.mubr.f32.gmra.mxu0 %v215
        %v431 = vpop.f32.mrf.mxu0
        %v432 = vadd.f32 0.0, %v431
        %v433 = vpop.f32.mrf.mxu0
        %434 = vmatprep.mubr.f32.mxu0 %v218
        %435 = vmatmul.mubr.f32.gmra.mxu0 %v217
        %v436 = vpop.f32.mrf.mxu0
        %v437 = vadd.f32 0.0, %v436
        %v438 = vpop.f32.mrf.mxu0
        %439 = vmatprep.mubr.f32.mxu0 %v220
        %440 = vmatmul.mubr.f32.gmra.mxu0 %v219
        %v441 = vpop.f32.mrf.mxu0
        %v442 = vadd.f32 0.0, %v441
        %v443 = vpop.f32.mrf.mxu0
        %444 = vmatprep.mubr.f32.mxu0 %v222
        %445 = vmatmul.mubr.f32.gmra.mxu0 %v221
        %v446 = vpop.f32.mrf.mxu0
        %v447 = vadd.f32 0.0, %v446
        %v448 = vpop.f32.mrf.mxu0
        %449 = vmatprep.mubr.f32.mxu0 %v224
        %450 = vmatmul.mubr.f32.gmra.mxu0 %v223
        %v451 = vpop.f32.mrf.mxu0
        %v452 = vadd.f32 0.0, %v451
        %v453 = vpop.f32.mrf.mxu0
        %454 = vmatprep.mubr.f32.mxu0 %v226
        %455 = vmatmul.mubr.f32.gmra.mxu0 %v225
        %v456 = vpop.f32.mrf.mxu0
        %v457 = vadd.f32 0.0, %v456
        %v458 = vpop.f32.mrf.mxu0
        %459 = vmatprep.mubr.f32.mxu0 %v228
        %460 = vmatmul.mubr.f32.gmra.mxu0 %v227
        %v461 = vpop.f32.mrf.mxu0
        %v462 = vadd.f32 0.0, %v461
        %v463 = vpop.f32.mrf.mxu0
        %464 = vmatprep.mubr.f32.mxu0 %v230
        %465 = vmatmul.mubr.f32.gmra.mxu0 %v229
        %v466 = vpop.f32.mrf.mxu0
        %v467 = vadd.f32 0.0, %v466
        %v468 = vpop.f32.mrf.mxu0
        %469 = vmatprep.mubr.f32.mxu0 %v232
        %470 = vmatmul.mubr.f32.gmra.mxu0 %v231
        %v471 = vpop.f32.mrf.mxu0
        %v472 = vadd.f32 0.0, %v471
        %v473 = vpop.f32.mrf.mxu0
        %474 = vmatprep.mubr.f32.mxu0 %v234
        %475 = vmatmul.mubr.f32.gmra.mxu0 %v233
        %v476 = vpop.f32.mrf.mxu0
        %v477 = vadd.f32 0.0, %v476
        %v478 = vpop.f32.mrf.mxu0
        %479 = vmatprep.mubr.f32.mxu0 %v236
        %480 = vmatmul.mubr.f32.gmra.mxu0 %v235
        %v481 = vpop.f32.mrf.mxu0
        %v482 = vadd.f32 0.0, %v481
        %v483 = vpop.f32.mrf.mxu0
        %484 = vmatprep.mubr.f32.mxu0 %v238
        %485 = vmatmul.mubr.f32.gmra.mxu0 %v237
        %v486 = vpop.f32.mrf.mxu0
        %v487 = vadd.f32 0.0, %v486
        %v488 = vpop.f32.mrf.mxu0
        %489 = vmatprep.mubr.f32.mxu0 %v240
        %490 = vmatmul.mubr.f32.gmra.mxu0 %v239
        %v491 = vpop.f32.mrf.mxu0
        %v492 = vadd.f32 0.0, %v491
        %v493 = vpop.f32.mrf.mxu0
        %494 = vmatprep.mubr.f32.mxu0 %v242
        %495 = vmatmul.mubr.f32.gmra.mxu0 %v241
        %v496 = vpop.f32.mrf.mxu0
        %v497 = vadd.f32 0.0, %v496
        %v498 = vpop.f32.mrf.mxu0
        %499 = vdwg.mxu0
        %v500 = vstv %s178
        %v501 = vmul.f32 %v500, %v342
        %v502 = vmul.f32 %v500, %v347
        %v503 = vmul.f32 %v500, %v352
        %v504 = vmul.f32 %v500, %v357
        %v505 = vmul.f32 %v500, %v362
        %v506 = vmul.f32 %v500, %v367
        %v507 = vmul.f32 %v500, %v372
        %v508 = vmul.f32 %v500, %v377
        %v509 = vmul.f32 %v500, %v382
        %v510 = vmul.f32 %v500, %v387
        %v511 = vmul.f32 %v500, %v392
        %v512 = vmul.f32 %v500, %v397
        %v513 = vmul.f32 %v500, %v402
        %v514 = vmul.f32 %v500, %v407
        %v515 = vmul.f32 %v500, %v412
        %v516 = vmul.f32 %v500, %v417
        %v517 = vmul.f32 %v500, %v422
        %v518 = vmul.f32 %v500, %v427
        %v519 = vmul.f32 %v500, %v432
        %v520 = vmul.f32 %v500, %v437
        %v521 = vmul.f32 %v500, %v442
        %v522 = vmul.f32 %v500, %v447
        %v523 = vmul.f32 %v500, %v452
        %v524 = vmul.f32 %v500, %v457
        %v525 = vmul.f32 %v500, %v462
        %v526 = vmul.f32 %v500, %v467
        %v527 = vmul.f32 %v500, %v472
        %v528 = vmul.f32 %v500, %v477
        %v529 = vmul.f32 %v500, %v482
        %v530 = vmul.f32 %v500, %v487
        %v531 = vmul.f32 %v500, %v492
        %v532 = vmul.f32 %v500, %v497
        %v533 = vadd.f32 %v243, %v501
        %v534 = vadd.f32 %v244, %v502
        %v535 = vadd.f32 %v245, %v503
        %v536 = vadd.f32 %v246, %v504
        %v537 = vadd.f32 %v247, %v505
        %v538 = vadd.f32 %v248, %v506
        %v539 = vadd.f32 %v249, %v507
        %v540 = vadd.f32 %v250, %v508
        %v541 = vadd.f32 %v251, %v509
        %v542 = vadd.f32 %v252, %v510
        %v543 = vadd.f32 %v253, %v511
        %v544 = vadd.f32 %v254, %v512
        %v545 = vadd.f32 %v255, %v513
        %v546 = vadd.f32 %v256, %v514
        %v547 = vadd.f32 %v257, %v515
        %v548 = vadd.f32 %v258, %v516
        %v549 = vadd.f32 %v259, %v517
        %v550 = vadd.f32 %v260, %v518
        %v551 = vadd.f32 %v261, %v519
        %v552 = vadd.f32 %v262, %v520
        %v553 = vadd.f32 %v263, %v521
        %v554 = vadd.f32 %v264, %v522
        %v555 = vadd.f32 %v265, %v523
        %v556 = vadd.f32 %v266, %v524
        %v557 = vadd.f32 %v267, %v525
        %v558 = vadd.f32 %v268, %v526
        %v559 = vadd.f32 %v269, %v527
        %v560 = vadd.f32 %v270, %v528
        %v561 = vadd.f32 %v271, %v529
        %v562 = vadd.f32 %v272, %v530
        %v563 = vadd.f32 %v273, %v531
        %v564 = vadd.f32 %v274, %v532
        %565 = vmatprep.subr.mxu0 0.0
        %566 = vmatpush1.msra.mxu0 %v516
        %567 = vmatprep.subr.mxu0 0.0
        %568 = vmatpush1.msra.mxu0 %v515
        %569 = vmatprep.subr.mxu0 0.0
        %570 = vmatpush1.msra.mxu0 %v514
        %571 = vmatprep.subr.mxu0 0.0
        %572 = vmatpush1.msra.mxu0 %v513
        %573 = vmatprep.subr.mxu0 0.0
        %574 = vmatpush1.msra.mxu0 %v512
        %575 = vmatprep.subr.mxu0 0.0
        %576 = vmatpush1.msra.mxu0 %v511
        %577 = vmatprep.subr.mxu0 0.0
        %578 = vmatpush1.msra.mxu0 %v510
        %579 = vmatprep.subr.mxu0 0.0
        %580 = vmatpush1.msra.mxu0 %v509
        %581 = vmatprep.subr.mxu0 0.0
        %582 = vmatpush1.msra.mxu0 %v508
        %583 = vmatprep.subr.mxu0 0.0
        %584 = vmatpush1.msra.mxu0 %v507
        %585 = vmatprep.subr.mxu0 0.0
        %586 = vmatpush1.msra.mxu0 %v506
        %587 = vmatprep.subr.mxu0 0.0
        %588 = vmatpush1.msra.mxu0 %v505
        %589 = vmatprep.subr.mxu0 0.0
        %590 = vmatpush1.msra.mxu0 %v504
        %591 = vmatprep.subr.mxu0 0.0
        %592 = vmatpush1.msra.mxu0 %v503
        %593 = vmatprep.subr.mxu0 0.0
        %594 = vmatpush1.msra.mxu0 %v502
        %595 = vmatprep.subr.mxu0 0.0
        %596 = vmatpush1.msra.mxu0 %v501
        %597 = vmatprep.subr.mxu0 0.0
        %598 = vmatpush2.msra.mxu0 %v532
        %599 = vmatprep.subr.mxu0 0.0
        %600 = vmatpush2.msra.mxu0 %v531
        %601 = vmatprep.subr.mxu0 0.0
        %602 = vmatpush2.msra.mxu0 %v530
        %603 = vmatprep.subr.mxu0 0.0
        %604 = vmatpush2.msra.mxu0 %v529
        %605 = vmatprep.subr.mxu0 0.0
        %606 = vmatpush2.msra.mxu0 %v528
        %607 = vmatprep.subr.mxu0 0.0
        %608 = vmatpush2.msra.mxu0 %v527
        %609 = vmatprep.subr.mxu0 0.0
        %610 = vmatpush2.msra.mxu0 %v526
        %611 = vmatprep.subr.mxu0 0.0
        %612 = vmatpush2.msra.mxu0 %v525
        %613 = vmatprep.subr.mxu0 0.0
        %614 = vmatpush2.msra.mxu0 %v524
        %615 = vmatprep.subr.mxu0 0.0
        %616 = vmatpush2.msra.mxu0 %v523
        %617 = vmatprep.subr.mxu0 0.0
        %618 = vmatpush2.msra.mxu0 %v522
        %619 = vmatprep.subr.mxu0 0.0
        %620 = vmatpush2.msra.mxu0 %v521
        %621 = vmatprep.subr.mxu0 0.0
        %622 = vmatpush2.msra.mxu0 %v520
        %623 = vmatprep.subr.mxu0 0.0
        %624 = vmatpush2.msra.mxu0 %v519
        %625 = vmatprep.subr.mxu0 0.0
        %626 = vmatpush2.msra.mxu0 %v518
        %627 = vmatprep.subr.mxu0 0.0
        %628 = vmatpush2.msra.mxu0 %v517
        %629 = vmatprep.mubr.f32.mxu0 %v180
        %630 = vmatmul.mubr.f32.gmra.mxu0 %v179
        %v631 = vpop.f32.mrf.mxu0
        %v632 = vadd.f32 0.0, %v631
        %v633 = vpop.f32.mrf.mxu0
        %634 = vmatprep.mubr.f32.mxu0 %v182
        %635 = vmatmul.mubr.f32.gmra.mxu0 %v181
        %v636 = vpop.f32.mrf.mxu0
        %v637 = vadd.f32 0.0, %v636
        %v638 = vpop.f32.mrf.mxu0
        %639 = vmatprep.mubr.f32.mxu0 %v184
        %640 = vmatmul.mubr.f32.gmra.mxu0 %v183
        %v641 = vpop.f32.mrf.mxu0
        %v642 = vadd.f32 0.0, %v641
        %v643 = vpop.f32.mrf.mxu0
        %644 = vmatprep.mubr.f32.mxu0 %v186
        %645 = vmatmul.mubr.f32.gmra.mxu0 %v185
        %v646 = vpop.f32.mrf.mxu0
        %v647 = vadd.f32 0.0, %v646
        %v648 = vpop.f32.mrf.mxu0
        %649 = vmatprep.mubr.f32.mxu0 %v188
        %650 = vmatmul.mubr.f32.gmra.mxu0 %v187
        %v651 = vpop.f32.mrf.mxu0
        %v652 = vadd.f32 0.0, %v651
        %v653 = vpop.f32.mrf.mxu0
        %654 = vmatprep.mubr.f32.mxu0 %v190
        %655 = vmatmul.mubr.f32.gmra.mxu0 %v189
        %v656 = vpop.f32.mrf.mxu0
        %v657 = vadd.f32 0.0, %v656
        %v658 = vpop.f32.mrf.mxu0
        %659 = vmatprep.mubr.f32.mxu0 %v192
        %660 = vmatmul.mubr.f32.gmra.mxu0 %v191
        %v661 = vpop.f32.mrf.mxu0
        %v662 = vadd.f32 0.0, %v661
        %v663 = vpop.f32.mrf.mxu0
        %664 = vmatprep.mubr.f32.mxu0 %v194
        %665 = vmatmul.mubr.f32.gmra.mxu0 %v193
        %v666 = vpop.f32.mrf.mxu0
        %v667 = vadd.f32 0.0, %v666
        %v668 = vpop.f32.mrf.mxu0
        %669 = vmatprep.mubr.f32.mxu0 %v196
        %670 = vmatmul.mubr.f32.gmra.mxu0 %v195
        %v671 = vpop.f32.mrf.mxu0
        %v672 = vadd.f32 0.0, %v671
        %v673 = vpop.f32.mrf.mxu0
        %674 = vmatprep.mubr.f32.mxu0 %v198
        %675 = vmatmul.mubr.f32.gmra.mxu0 %v197
        %v676 = vpop.f32.mrf.mxu0
        %v677 = vadd.f32 0.0, %v676
        %v678 = vpop.f32.mrf.mxu0
        %679 = vmatprep.mubr.f32.mxu0 %v200
        %680 = vmatmul.mubr.f32.gmra.mxu0 %v199
        %v681 = vpop.f32.mrf.mxu0
        %v682 = vadd.f32 0.0, %v681
        %v683 = vpop.f32.mrf.mxu0
        %684 = vmatprep.mubr.f32.mxu0 %v202
        %685 = vmatmul.mubr.f32.gmra.mxu0 %v201
        %v686 = vpop.f32.mrf.mxu0
        %v687 = vadd.f32 0.0, %v686
        %v688 = vpop.f32.mrf.mxu0
        %689 = vmatprep.mubr.f32.mxu0 %v204
        %690 = vmatmul.mubr.f32.gmra.mxu0 %v203
        %v691 = vpop.f32.mrf.mxu0
        %v692 = vadd.f32 0.0, %v691
        %v693 = vpop.f32.mrf.mxu0
        %694 = vmatprep.mubr.f32.mxu0 %v206
        %695 = vmatmul.mubr.f32.gmra.mxu0 %v205
        %v696 = vpop.f32.mrf.mxu0
        %v697 = vadd.f32 0.0, %v696
        %v698 = vpop.f32.mrf.mxu0
        %699 = vmatprep.mubr.f32.mxu0 %v208
        %700 = vmatmul.mubr.f32.gmra.mxu0 %v207
        %v701 = vpop.f32.mrf.mxu0
        %v702 = vadd.f32 0.0, %v701
        %v703 = vpop.f32.mrf.mxu0
        %704 = vmatprep.mubr.f32.mxu0 %v210
        %705 = vmatmul.mubr.f32.gmra.mxu0 %v209
        %v706 = vpop.f32.mrf.mxu0
        %v707 = vadd.f32 0.0, %v706
        %v708 = vpop.f32.mrf.mxu0
        %709 = vmatprep.mubr.f32.mxu0 %v212
        %710 = vmatmul.mubr.f32.gmra.mxu0 %v211
        %v711 = vpop.f32.mrf.mxu0
        %v712 = vadd.f32 0.0, %v711
        %v713 = vpop.f32.mrf.mxu0
        %714 = vmatprep.mubr.f32.mxu0 %v214
        %715 = vmatmul.mubr.f32.gmra.mxu0 %v213
        %v716 = vpop.f32.mrf.mxu0
        %v717 = vadd.f32 0.0, %v716
        %v718 = vpop.f32.mrf.mxu0
        %719 = vmatprep.mubr.f32.mxu0 %v216
        %720 = vmatmul.mubr.f32.gmra.mxu0 %v215
        %v721 = vpop.f32.mrf.mxu0
        %v722 = vadd.f32 0.0, %v721
        %v723 = vpop.f32.mrf.mxu0
        %724 = vmatprep.mubr.f32.mxu0 %v218
        %725 = vmatmul.mubr.f32.gmra.mxu0 %v217
        %v726 = vpop.f32.mrf.mxu0
        %v727 = vadd.f32 0.0, %v726
        %v728 = vpop.f32.mrf.mxu0
        %729 = vmatprep.mubr.f32.mxu0 %v220
        %730 = vmatmul.mubr.f32.gmra.mxu0 %v219
        %v731 = vpop.f32.mrf.mxu0
        %v732 = vadd.f32 0.0, %v731
        %v733 = vpop.f32.mrf.mxu0
        %734 = vmatprep.mubr.f32.mxu0 %v222
        %735 = vmatmul.mubr.f32.gmra.mxu0 %v221
        %v736 = vpop.f32.mrf.mxu0
        %v737 = vadd.f32 0.0, %v736
        %v738 = vpop.f32.mrf.mxu0
        %739 = vmatprep.mubr.f32.mxu0 %v224
        %740 = vmatmul.mubr.f32.gmra.mxu0 %v223
        %v741 = vpop.f32.mrf.mxu0
        %v742 = vadd.f32 0.0, %v741
        %v743 = vpop.f32.mrf.mxu0
        %744 = vmatprep.mubr.f32.mxu0 %v226
        %745 = vmatmul.mubr.f32.gmra.mxu0 %v225
        %v746 = vpop.f32.mrf.mxu0
        %v747 = vadd.f32 0.0, %v746
        %v748 = vpop.f32.mrf.mxu0
        %749 = vmatprep.mubr.f32.mxu0 %v228
        %750 = vmatmul.mubr.f32.gmra.mxu0 %v227
        %v751 = vpop.f32.mrf.mxu0
        %v752 = vadd.f32 0.0, %v751
        %v753 = vpop.f32.mrf.mxu0
        %754 = vmatprep.mubr.f32.mxu0 %v230
        %755 = vmatmul.mubr.f32.gmra.mxu0 %v229
        %v756 = vpop.f32.mrf.mxu0
        %v757 = vadd.f32 0.0, %v756
        %v758 = vpop.f32.mrf.mxu0
        %759 = vmatprep.mubr.f32.mxu0 %v232
        %760 = vmatmul.mubr.f32.gmra.mxu0 %v231
        %v761 = vpop.f32.mrf.mxu0
        %v762 = vadd.f32 0.0, %v761
        %v763 = vpop.f32.mrf.mxu0
        %764 = vmatprep.mubr.f32.mxu0 %v234
        %765 = vmatmul.mubr.f32.gmra.mxu0 %v233
        %v766 = vpop.f32.mrf.mxu0
        %v767 = vadd.f32 0.0, %v766
        %v768 = vpop.f32.mrf.mxu0
        %769 = vmatprep.mubr.f32.mxu0 %v236
        %770 = vmatmul.mubr.f32.gmra.mxu0 %v235
        %v771 = vpop.f32.mrf.mxu0
        %v772 = vadd.f32 0.0, %v771
        %v773 = vpop.f32.mrf.mxu0
        %774 = vmatprep.mubr.f32.mxu0 %v238
        %775 = vmatmul.mubr.f32.gmra.mxu0 %v237
        %v776 = vpop.f32.mrf.mxu0
        %v777 = vadd.f32 0.0, %v776
        %v778 = vpop.f32.mrf.mxu0
        %779 = vmatprep.mubr.f32.mxu0 %v240
        %780 = vmatmul.mubr.f32.gmra.mxu0 %v239
        %v781 = vpop.f32.mrf.mxu0
        %v782 = vadd.f32 0.0, %v781
        %v783 = vpop.f32.mrf.mxu0
        %784 = vmatprep.mubr.f32.mxu0 %v242
        %785 = vmatmul.mubr.f32.gmra.mxu0 %v241
        %v786 = vpop.f32.mrf.mxu0
        %v787 = vadd.f32 0.0, %v786
        %v788 = vpop.f32.mrf.mxu0
        %789 = vdwg.mxu0
        %v790 = vmul.f32 %v500, %v632
        %v791 = vmul.f32 %v500, %v637
        %v792 = vmul.f32 %v500, %v642
        %v793 = vmul.f32 %v500, %v647
        %v794 = vmul.f32 %v500, %v652
        %v795 = vmul.f32 %v500, %v657
        %v796 = vmul.f32 %v500, %v662
        %v797 = vmul.f32 %v500, %v667
        %v798 = vmul.f32 %v500, %v672
        %v799 = vmul.f32 %v500, %v677
        %v800 = vmul.f32 %v500, %v682
        %v801 = vmul.f32 %v500, %v687
        %v802 = vmul.f32 %v500, %v692
        %v803 = vmul.f32 %v500, %v697
        %v804 = vmul.f32 %v500, %v702
        %v805 = vmul.f32 %v500, %v707
        %v806 = vmul.f32 %v500, %v712
        %v807 = vmul.f32 %v500, %v717
        %v808 = vmul.f32 %v500, %v722
        %v809 = vmul.f32 %v500, %v727
        %v810 = vmul.f32 %v500, %v732
        %v811 = vmul.f32 %v500, %v737
        %v812 = vmul.f32 %v500, %v742
        %v813 = vmul.f32 %v500, %v747
        %v814 = vmul.f32 %v500, %v752
        %v815 = vmul.f32 %v500, %v757
        %v816 = vmul.f32 %v500, %v762
        %v817 = vmul.f32 %v500, %v767
        %v818 = vmul.f32 %v500, %v772
        %v819 = vmul.f32 %v500, %v777
        %v820 = vmul.f32 %v500, %v782
        %v821 = vmul.f32 %v500, %v787
        %v822 = vadd.f32 %v533, %v790
        %v823 = vadd.f32 %v534, %v791
        %v824 = vadd.f32 %v535, %v792
        %v825 = vadd.f32 %v536, %v793
        %v826 = vadd.f32 %v537, %v794
        %v827 = vadd.f32 %v538, %v795
        %v828 = vadd.f32 %v539, %v796
        %v829 = vadd.f32 %v540, %v797
        %v830 = vadd.f32 %v541, %v798
        %v831 = vadd.f32 %v542, %v799
        %v832 = vadd.f32 %v543, %v800
        %v833 = vadd.f32 %v544, %v801
        %v834 = vadd.f32 %v545, %v802
        %v835 = vadd.f32 %v546, %v803
        %v836 = vadd.f32 %v547, %v804
        %v837 = vadd.f32 %v548, %v805
        %v838 = vadd.f32 %v549, %v806
        %v839 = vadd.f32 %v550, %v807
        %v840 = vadd.f32 %v551, %v808
        %v841 = vadd.f32 %v552, %v809
        %v842 = vadd.f32 %v553, %v810
        %v843 = vadd.f32 %v554, %v811
        %v844 = vadd.f32 %v555, %v812
        %v845 = vadd.f32 %v556, %v813
        %v846 = vadd.f32 %v557, %v814
        %v847 = vadd.f32 %v558, %v815
        %v848 = vadd.f32 %v559, %v816
        %v849 = vadd.f32 %v560, %v817
        %v850 = vadd.f32 %v561, %v818
        %v851 = vadd.f32 %v562, %v819
        %v852 = vadd.f32 %v563, %v820
        %v853 = vadd.f32 %v564, %v821
        %854 = vmatprep.subr.mxu0 0.0
        %855 = vmatpush1.msra.mxu0 %v805
        %856 = vmatprep.subr.mxu0 0.0
        %857 = vmatpush1.msra.mxu0 %v804
        %858 = vmatprep.subr.mxu0 0.0
        %859 = vmatpush1.msra.mxu0 %v803
        %860 = vmatprep.subr.mxu0 0.0
        %861 = vmatpush1.msra.mxu0 %v802
        %862 = vmatprep.subr.mxu0 0.0
        %863 = vmatpush1.msra.mxu0 %v801
        %864 = vmatprep.subr.mxu0 0.0
        %865 = vmatpush1.msra.mxu0 %v800
        %866 = vmatprep.subr.mxu0 0.0
        %867 = vmatpush1.msra.mxu0 %v799
        %868 = vmatprep.subr.mxu0 0.0
        %869 = vmatpush1.msra.mxu0 %v798
        %870 = vmatprep.subr.mxu0 0.0
        %871 = vmatpush1.msra.mxu0 %v797
        %872 = vmatprep.subr.mxu0 0.0
        %873 = vmatpush1.msra.mxu0 %v796
        %874 = vmatprep.subr.mxu0 0.0
        %875 = vmatpush1.msra.mxu0 %v795
        %876 = vmatprep.subr.mxu0 0.0
        %877 = vmatpush1.msra.mxu0 %v794
        %878 = vmatprep.subr.mxu0 0.0
        %879 = vmatpush1.msra.mxu0 %v793
        %880 = vmatprep.subr.mxu0 0.0
        %881 = vmatpush1.msra.mxu0 %v792
        %882 = vmatprep.subr.mxu0 0.0
        %883 = vmatpush1.msra.mxu0 %v791
        %884 = vmatprep.subr.mxu0 0.0
        %885 = vmatpush1.msra.mxu0 %v790
        %886 = vmatprep.subr.mxu0 0.0
        %887 = vmatpush2.msra.mxu0 %v821
        %888 = vmatprep.subr.mxu0 0.0
        %889 = vmatpush2.msra.mxu0 %v820
        %890 = vmatprep.subr.mxu0 0.0
        %891 = vmatpush2.msra.mxu0 %v819
        %892 = vmatprep.subr.mxu0 0.0
        %893 = vmatpush2.msra.mxu0 %v818
        %894 = vmatprep.subr.mxu0 0.0
        %895 = vmatpush2.msra.mxu0 %v817
        %896 = vmatprep.subr.mxu0 0.0
        %897 = vmatpush2.msra.mxu0 %v816
        %898 = vmatprep.subr.mxu0 0.0
        %899 = vmatpush2.msra.mxu0 %v815
        %900 = vmatprep.subr.mxu0 0.0
        %901 = vmatpush2.msra.mxu0 %v814
        %902 = vmatprep.subr.mxu0 0.0
        %903 = vmatpush2.msra.mxu0 %v813
        %904 = vmatprep.subr.mxu0 0.0
        %905 = vmatpush2.msra.mxu0 %v812
        %906 = vmatprep.subr.mxu0 0.0
        %907 = vmatpush2.msra.mxu0 %v811
        %908 = vmatprep.subr.mxu0 0.0
        %909 = vmatpush2.msra.mxu0 %v810
        %910 = vmatprep.subr.mxu0 0.0
        %911 = vmatpush2.msra.mxu0 %v809
        %912 = vmatprep.subr.mxu0 0.0
        %913 = vmatpush2.msra.mxu0 %v808
        %914 = vmatprep.subr.mxu0 0.0
        %915 = vmatpush2.msra.mxu0 %v807
        %916 = vmatprep.subr.mxu0 0.0
        %917 = vmatpush2.msra.mxu0 %v806
        %918 = vmatprep.mubr.f32.mxu0 %v180
        %919 = vmatmul.mubr.f32.gmra.mxu0 %v179
        %v920 = vpop.f32.mrf.mxu0
        %v921 = vadd.f32 0.0, %v920
        %v922 = vpop.f32.mrf.mxu0
        %923 = vmatprep.mubr.f32.mxu0 %v182
        %924 = vmatmul.mubr.f32.gmra.mxu0 %v181
        %v925 = vpop.f32.mrf.mxu0
        %v926 = vadd.f32 0.0, %v925
        %v927 = vpop.f32.mrf.mxu0
        %928 = vmatprep.mubr.f32.mxu0 %v184
        %929 = vmatmul.mubr.f32.gmra.mxu0 %v183
        %v930 = vpop.f32.mrf.mxu0
        %v931 = vadd.f32 0.0, %v930
        %v932 = vpop.f32.mrf.mxu0
        %933 = vmatprep.mubr.f32.mxu0 %v186
        %934 = vmatmul.mubr.f32.gmra.mxu0 %v185
        %v935 = vpop.f32.mrf.mxu0
        %v936 = vadd.f32 0.0, %v935
        %v937 = vpop.f32.mrf.mxu0
        %938 = vmatprep.mubr.f32.mxu0 %v188
        %939 = vmatmul.mubr.f32.gmra.mxu0 %v187
        %v940 = vpop.f32.mrf.mxu0
        %v941 = vadd.f32 0.0, %v940
        %v942 = vpop.f32.mrf.mxu0
        %943 = vmatprep.mubr.f32.mxu0 %v190
        %944 = vmatmul.mubr.f32.gmra.mxu0 %v189
        %v945 = vpop.f32.mrf.mxu0
        %v946 = vadd.f32 0.0, %v945
        %v947 = vpop.f32.mrf.mxu0
        %948 = vmatprep.mubr.f32.mxu0 %v192
        %949 = vmatmul.mubr.f32.gmra.mxu0 %v191
        %v950 = vpop.f32.mrf.mxu0
        %v951 = vadd.f32 0.0, %v950
        %v952 = vpop.f32.mrf.mxu0
        %953 = vmatprep.mubr.f32.mxu0 %v194
        %954 = vmatmul.mubr.f32.gmra.mxu0 %v193
        %v955 = vpop.f32.mrf.mxu0
        %v956 = vadd.f32 0.0, %v955
        %v957 = vpop.f32.mrf.mxu0
        %958 = vmatprep.mubr.f32.mxu0 %v196
        %959 = vmatmul.mubr.f32.gmra.mxu0 %v195
        %v960 = vpop.f32.mrf.mxu0
        %v961 = vadd.f32 0.0, %v960
        %v962 = vpop.f32.mrf.mxu0
        %963 = vmatprep.mubr.f32.mxu0 %v198
        %964 = vmatmul.mubr.f32.gmra.mxu0 %v197
        %v965 = vpop.f32.mrf.mxu0
        %v966 = vadd.f32 0.0, %v965
        %v967 = vpop.f32.mrf.mxu0
        %968 = vmatprep.mubr.f32.mxu0 %v200
        %969 = vmatmul.mubr.f32.gmra.mxu0 %v199
        %v970 = vpop.f32.mrf.mxu0
        %v971 = vadd.f32 0.0, %v970
        %v972 = vpop.f32.mrf.mxu0
        %973 = vmatprep.mubr.f32.mxu0 %v202
        %974 = vmatmul.mubr.f32.gmra.mxu0 %v201
        %v975 = vpop.f32.mrf.mxu0
        %v976 = vadd.f32 0.0, %v975
        %v977 = vpop.f32.mrf.mxu0
        %978 = vmatprep.mubr.f32.mxu0 %v204
        %979 = vmatmul.mubr.f32.gmra.mxu0 %v203
        %v980 = vpop.f32.mrf.mxu0
        %v981 = vadd.f32 0.0, %v980
        %v982 = vpop.f32.mrf.mxu0
        %983 = vmatprep.mubr.f32.mxu0 %v206
        %984 = vmatmul.mubr.f32.gmra.mxu0 %v205
        %v985 = vpop.f32.mrf.mxu0
        %v986 = vadd.f32 0.0, %v985
        %v987 = vpop.f32.mrf.mxu0
        %988 = vmatprep.mubr.f32.mxu0 %v208
        %989 = vmatmul.mubr.f32.gmra.mxu0 %v207
        %v990 = vpop.f32.mrf.mxu0
        %v991 = vadd.f32 0.0, %v990
        %v992 = vpop.f32.mrf.mxu0
        %993 = vmatprep.mubr.f32.mxu0 %v210
        %994 = vmatmul.mubr.f32.gmra.mxu0 %v209
        %v995 = vpop.f32.mrf.mxu0
        %v996 = vadd.f32 0.0, %v995
        %v997 = vpop.f32.mrf.mxu0
        %998 = vmatprep.mubr.f32.mxu0 %v212
        %999 = vmatmul.mubr.f32.gmra.mxu0 %v211
        %v1000 = vpop.f32.mrf.mxu0
        %v1001 = vadd.f32 0.0, %v1000
        %v1002 = vpop.f32.mrf.mxu0
        %1003 = vmatprep.mubr.f32.mxu0 %v214
        %1004 = vmatmul.mubr.f32.gmra.mxu0 %v213
        %v1005 = vpop.f32.mrf.mxu0
        %v1006 = vadd.f32 0.0, %v1005
        %v1007 = vpop.f32.mrf.mxu0
        %1008 = vmatprep.mubr.f32.mxu0 %v216
        %1009 = vmatmul.mubr.f32.gmra.mxu0 %v215
        %v1010 = vpop.f32.mrf.mxu0
        %v1011 = vadd.f32 0.0, %v1010
        %v1012 = vpop.f32.mrf.mxu0
        %1013 = vmatprep.mubr.f32.mxu0 %v218
        %1014 = vmatmul.mubr.f32.gmra.mxu0 %v217
        %v1015 = vpop.f32.mrf.mxu0
        %v1016 = vadd.f32 0.0, %v1015
        %v1017 = vpop.f32.mrf.mxu0
        %1018 = vmatprep.mubr.f32.mxu0 %v220
        %1019 = vmatmul.mubr.f32.gmra.mxu0 %v219
        %v1020 = vpop.f32.mrf.mxu0
        %v1021 = vadd.f32 0.0, %v1020
        %v1022 = vpop.f32.mrf.mxu0
        %1023 = vmatprep.mubr.f32.mxu0 %v222
        %1024 = vmatmul.mubr.f32.gmra.mxu0 %v221
        %v1025 = vpop.f32.mrf.mxu0
        %v1026 = vadd.f32 0.0, %v1025
        %v1027 = vpop.f32.mrf.mxu0
        %1028 = vmatprep.mubr.f32.mxu0 %v224
        %1029 = vmatmul.mubr.f32.gmra.mxu0 %v223
        %v1030 = vpop.f32.mrf.mxu0
        %v1031 = vadd.f32 0.0, %v1030
        %v1032 = vpop.f32.mrf.mxu0
        %1033 = vmatprep.mubr.f32.mxu0 %v226
        %1034 = vmatmul.mubr.f32.gmra.mxu0 %v225
        %v1035 = vpop.f32.mrf.mxu0
        %v1036 = vadd.f32 0.0, %v1035
        %v1037 = vpop.f32.mrf.mxu0
        %1038 = vmatprep.mubr.f32.mxu0 %v228
        %1039 = vmatmul.mubr.f32.gmra.mxu0 %v227
        %v1040 = vpop.f32.mrf.mxu0
        %v1041 = vadd.f32 0.0, %v1040
        %v1042 = vpop.f32.mrf.mxu0
        %1043 = vmatprep.mubr.f32.mxu0 %v230
        %1044 = vmatmul.mubr.f32.gmra.mxu0 %v229
        %v1045 = vpop.f32.mrf.mxu0
        %v1046 = vadd.f32 0.0, %v1045
        %v1047 = vpop.f32.mrf.mxu0
        %1048 = vmatprep.mubr.f32.mxu0 %v232
        %1049 = vmatmul.mubr.f32.gmra.mxu0 %v231
        %v1050 = vpop.f32.mrf.mxu0
        %v1051 = vadd.f32 0.0, %v1050
        %v1052 = vpop.f32.mrf.mxu0
        %1053 = vmatprep.mubr.f32.mxu0 %v234
        %1054 = vmatmul.mubr.f32.gmra.mxu0 %v233
        %v1055 = vpop.f32.mrf.mxu0
        %v1056 = vadd.f32 0.0, %v1055
        %v1057 = vpop.f32.mrf.mxu0
        %1058 = vmatprep.mubr.f32.mxu0 %v236
        %1059 = vmatmul.mubr.f32.gmra.mxu0 %v235
        %v1060 = vpop.f32.mrf.mxu0
        %v1061 = vadd.f32 0.0, %v1060
        %v1062 = vpop.f32.mrf.mxu0
        %1063 = vmatprep.mubr.f32.mxu0 %v238
        %1064 = vmatmul.mubr.f32.gmra.mxu0 %v237
        %v1065 = vpop.f32.mrf.mxu0
        %v1066 = vadd.f32 0.0, %v1065
        %v1067 = vpop.f32.mrf.mxu0
        %1068 = vmatprep.mubr.f32.mxu0 %v240
        %1069 = vmatmul.mubr.f32.gmra.mxu0 %v239
        %v1070 = vpop.f32.mrf.mxu0
        %v1071 = vadd.f32 0.0, %v1070
        %v1072 = vpop.f32.mrf.mxu0
        %1073 = vmatprep.mubr.f32.mxu0 %v242
        %1074 = vmatmul.mubr.f32.gmra.mxu0 %v241
        %v1075 = vpop.f32.mrf.mxu0
        %v1076 = vadd.f32 0.0, %v1075
        %v1077 = vpop.f32.mrf.mxu0
        %1078 = vdwg.mxu0
        %v1079 = vmul.f32 %v500, %v921
        %v1080 = vmul.f32 %v500, %v926
        %v1081 = vmul.f32 %v500, %v931
        %v1082 = vmul.f32 %v500, %v936
        %v1083 = vmul.f32 %v500, %v941
        %v1084 = vmul.f32 %v500, %v946
        %v1085 = vmul.f32 %v500, %v951
        %v1086 = vmul.f32 %v500, %v956
        %v1087 = vmul.f32 %v500, %v961
        %v1088 = vmul.f32 %v500, %v966
        %v1089 = vmul.f32 %v500, %v971
        %v1090 = vmul.f32 %v500, %v976
        %v1091 = vmul.f32 %v500, %v981
        %v1092 = vmul.f32 %v500, %v986
        %v1093 = vmul.f32 %v500, %v991
        %v1094 = vmul.f32 %v500, %v996
        %v1095 = vmul.f32 %v500, %v1001
        %v1096 = vmul.f32 %v500, %v1006
        %v1097 = vmul.f32 %v500, %v1011
        %v1098 = vmul.f32 %v500, %v1016
        %v1099 = vmul.f32 %v500, %v1021
        %v1100 = vmul.f32 %v500, %v1026
        %v1101 = vmul.f32 %v500, %v1031
        %v1102 = vmul.f32 %v500, %v1036
        %v1103 = vmul.f32 %v500, %v1041
        %v1104 = vmul.f32 %v500, %v1046
        %v1105 = vmul.f32 %v500, %v1051
        %v1106 = vmul.f32 %v500, %v1056
        %v1107 = vmul.f32 %v500, %v1061
        %v1108 = vmul.f32 %v500, %v1066
        %v1109 = vmul.f32 %v500, %v1071
        %v1110 = vmul.f32 %v500, %v1076
        %v1111 = vadd.f32 %v822, %v1079
        %v1112 = vadd.f32 %v823, %v1080
        %v1113 = vadd.f32 %v824, %v1081
        %v1114 = vadd.f32 %v825, %v1082
        %v1115 = vadd.f32 %v826, %v1083
        %v1116 = vadd.f32 %v827, %v1084
        %v1117 = vadd.f32 %v828, %v1085
        %v1118 = vadd.f32 %v829, %v1086
        %v1119 = vadd.f32 %v830, %v1087
        %v1120 = vadd.f32 %v831, %v1088
        %v1121 = vadd.f32 %v832, %v1089
        %v1122 = vadd.f32 %v833, %v1090
        %v1123 = vadd.f32 %v834, %v1091
        %v1124 = vadd.f32 %v835, %v1092
        %v1125 = vadd.f32 %v836, %v1093
        %v1126 = vadd.f32 %v837, %v1094
        %v1127 = vadd.f32 %v838, %v1095
        %v1128 = vadd.f32 %v839, %v1096
        %v1129 = vadd.f32 %v840, %v1097
        %v1130 = vadd.f32 %v841, %v1098
        %v1131 = vadd.f32 %v842, %v1099
        %v1132 = vadd.f32 %v843, %v1100
        %v1133 = vadd.f32 %v844, %v1101
        %v1134 = vadd.f32 %v845, %v1102
        %v1135 = vadd.f32 %v846, %v1103
        %v1136 = vadd.f32 %v847, %v1104
        %v1137 = vadd.f32 %v848, %v1105
        %v1138 = vadd.f32 %v849, %v1106
        %v1139 = vadd.f32 %v850, %v1107
        %v1140 = vadd.f32 %v851, %v1108
        %v1141 = vadd.f32 %v852, %v1109
        %v1142 = vadd.f32 %v853, %v1110
        %1143 = vst [vmem:[%s177] sm:$0xff] %v1111
        %1144 = vst [vmem:[%s177 + $0x8] sm:$0xff] %v1112
        %1145 = vst [vmem:[%s177 + $0x10] sm:$0xff] %v1113
        %1146 = vst [vmem:[%s177 + $0x18] sm:$0xff] %v1114
        %1147 = vst [vmem:[%s177 + $0x20] sm:$0xff] %v1115
        %1148 = vst [vmem:[%s177 + $0x28] sm:$0xff] %v1116
        %1149 = vst [vmem:[%s177 + $0x30] sm:$0xff] %v1117
        %1150 = vst [vmem:[%s177 + $0x38] sm:$0xff] %v1118
        %1151 = vst [vmem:[%s177 + $0x40] sm:$0xff] %v1119
        %1152 = vst [vmem:[%s177 + $0x48] sm:$0xff] %v1120
        %1153 = vst [vmem:[%s177 + $0x50] sm:$0xff] %v1121
        %1154 = vst [vmem:[%s177 + $0x58] sm:$0xff] %v1122
        %1155 = vst [vmem:[%s177 + $0x60] sm:$0xff] %v1123
        %1156 = vst [vmem:[%s177 + $0x68] sm:$0xff] %v1124
        %1157 = vst [vmem:[%s177 + $0x70] sm:$0xff] %v1125
        %1158 = vst [vmem:[%s177 + $0x78] sm:$0xff] %v1126
        %1159 = vst [vmem:[%s177 + $0x80] sm:$0xff] %v1127
        %1160 = vst [vmem:[%s177 + $0x88] sm:$0xff] %v1128
        %1161 = vst [vmem:[%s177 + $0x90] sm:$0xff] %v1129
        %1162 = vst [vmem:[%s177 + $0x98] sm:$0xff] %v1130
        %1163 = vst [vmem:[%s177 + $0xa0] sm:$0xff] %v1131
        %1164 = vst [vmem:[%s177 + $0xa8] sm:$0xff] %v1132
        %1165 = vst [vmem:[%s177 + $0xb0] sm:$0xff] %v1133
        %1166 = vst [vmem:[%s177 + $0xb8] sm:$0xff] %v1134
        %1167 = vst [vmem:[%s177 + $0xc0] sm:$0xff] %v1135
        %1168 = vst [vmem:[%s177 + $0xc8] sm:$0xff] %v1136
        %1169 = vst [vmem:[%s177 + $0xd0] sm:$0xff] %v1137
        %1170 = vst [vmem:[%s177 + $0xd8] sm:$0xff] %v1138
        %1171 = vst [vmem:[%s177 + $0xe0] sm:$0xff] %v1139
        %1172 = vst [vmem:[%s177 + $0xe8] sm:$0xff] %v1140
        %1173 = vst [vmem:[%s177 + $0xf0] sm:$0xff] %v1141
        %1174 = vst [vmem:[%s177 + $0xf8] sm:$0xff] %v1142
        %s1175 = sand.u32 %s77, 1
        %s1176 = scalar_lea.sflag [#allocation6], %s1175
        %s1177 = sand.u32 %s77, 1
        %s1178 = smul.addr %s1177, 256
        %s1179 = scalar_lea.vmem [#allocation9], %s1178
        // Predicated region
        $region37: #{tpu_custom_call.1} parent=27 // pred_check
          %p1180 = pneg %p87
        $region38: #{tpu_custom_call.1} parent=27 // pred_check_branch
          %1182 = sbr.rel (%p1180) target = $region40
        $region39: #{tpu_custom_call.1} parent=27 // pred_region
          %s1184 = ssub.s32 4096, 4096
          %1185 = vsyncadd %s1176, %s1184
          %s1186 = smul.addr %s22, 128
          %s1187 = scalar_lea.hbm %s3, %s1186
          %s1188 = sshll.u32 %s1179, 4
          %s1189 = int_to_ptr.vmem [resolvable:$true] %s1188
          %1194 = dma.vmem_to_hbm [thread:$0]  %s1189, 4096, %s1187, %s1176, 128, 512, 8
        $region40: #{tpu_custom_call.1} parent=27 // pred_fallthru
          _
      $region28: #{tpu_custom_call.1} parent=5 // pred_fallthru
        _
      %p1195 = scmp.le.s32.totalorder 2, %s17
      // Predicated region
      $region41: #{tpu_custom_call.1} parent=5 // pred_check
        %p1196 = pneg %p1195
      $region42: #{tpu_custom_call.1} parent=5 // pred_check_branch
        %1198 = sbr.rel (%p1196) target = $region44
      $region43: #{tpu_custom_call.1} parent=5 // pred_region
        %s1199 = ssub.s32 %s17, 2
        // Predicated region
        $region45: #{tpu_custom_call.1} parent=43 // pred_check
          %p1200 = pneg %p93
        $region46: #{tpu_custom_call.1} parent=43 // pred_check_branch
          %1202 = sbr.rel (%p1200) target = $region48
        $region47: #{tpu_custom_call.1} parent=43 // pred_region
          %s1203 = sand.u32 %s78, 1
          %s1204 = scalar_lea.sflag [#allocation6], %s1203
          %s1205 = sand.u32 %s78, 1
          %s1206 = smul.addr %s1205, 256
          %s1207 = scalar_lea.vmem [#allocation9], %s1206
          %1208 = dma.done %s1204, 4096
        $region48: #{tpu_custom_call.1} parent=43 // pred_fallthru
          _
      $region44: #{tpu_custom_call.1} parent=5 // pred_fallthru
        _
    $region6: #{tpu_custom_call.1} parent=1 // loop_footer
      %s21 = sadd.s32 1, %s17
    $region7: #{tpu_custom_call.1} parent=1 // loop_footer_branch
      %16 = sbr.rel target = $region3
    $region8: #{tpu_custom_call.1} parent=1 // loop_exit
      _
    %1209 = vsyncpa [#allocation5], 1
    %s1210 = scalar_lea.sflag [#allocation5], 1
    %1211 = vsyncpa %s1210, 1
    %1212 = vsyncpa [#allocation8], 1
    %s1213 = scalar_lea.sflag [#allocation8], 1
    %1214 = vsyncpa %s1213, 1
    %1215 = vsyncpa [#allocation6], 1
    %s1216 = scalar_lea.sflag [#allocation6], 1
    %1217 = vsyncpa %s1216, 1

// kernel: tpu_custom_call.1
$region0: #{tpu_custom_call.1}
  #allocation0 [shape = 'u32[]', space=smem, size = 0x4, offset = 0x4, fixed_abs, tag = 'smem constant byte address 0x4 - core index']
  #allocation1 [shape = 'u32[144,128]{1,0:T(1,128)}', space=vmem, size = 0x12000, scoped, tag = 'internal scratch']
  #allocation2 [shape = 's32[1]{0}', space=sflag, size = 0x4, scoped, tag = 'scoped memory for tpu_custom_call.1']
  #allocation3 [shape = 'f32[1]{0:T(128)S(6)}', space=smem, size = 0x200, scoped, tag = 'prefetched SMEM operand 0']
  %s0 = inlined_call_operand.<no memory space> [shape: f32[1], index: 0, kind: input, shape index: {}]
  %s1 = inlined_call_operand.hbm [shape: f32[256,256], index: 1, kind: input, shape index: {}]
  %s2 = inlined_call_operand.hbm [shape: f32[256,512], index: 2, kind: input, shape index: {}]
  %s3 = inlined_call_operand.hbm [shape: f32[256,512], index: 3, kind: output, shape index: {}]
  %s4 = sld [smem:[#allocation0]]
  $region49: #{tpu_custom_call.1} parent=0
    _
  %s6 = ssub.s32 1, %s4
  %s7 = scalar_select 0, %s6, %s4
  %8 = sst [smem:[#allocation3]] %s0
  $region1: #{tpu_custom_call.1} parent=0
    #allocation4 [shape = 'u8[262144]{0}', space=vmem, size = 0x40000, scoped, tag = 'input window, operand 1, single buffered']
    #allocation5 [shape = 's32[2]{0}', space=sflag, size = 0x8, scoped, tag = 'scoped memory for tpu_custom_call.1']
    #allocation6 [shape = 's32[2]{0}', space=sflag, size = 0x8, scoped, tag = 'scoped memory for tpu_custom_call.1']
    #allocation7 [shape = 'u8[262144]{0}', space=vmem, size = 0x40000, scoped, tag = 'input window, operand 2']
    #allocation8 [shape = 's32[2]{0}', space=sflag, size = 0x8, scoped, tag = 'scoped memory for tpu_custom_call.1']
    #allocation9 [shape = 'u8[262144]{0}', space=vmem, size = 0x40000, scoped, tag = 'output window, operand 0']
    %9 = vsyncpa [#allocation5], 0
    %10 = vsyncpa [#allocation8], 0
    %s11 = scalar_lea.sflag [#allocation8], 1
    %12 = vsyncpa %s11, 0
    %13 = vsyncpa [#allocation6], 0
    %s14 = scalar_lea.sflag [#allocation6], 1
    %15 = vsyncpa %s14, 0
    loop: start=0, step=1, limit=6
    $region2: #{tpu_custom_call.1} parent=1 // loop_pre_header
      _
    $region3: #{tpu_custom_call.1} parent=1 // loop_header
      %s17 = sphi 0, %s21
      %p18 = scmp.ge.s32.totalorder %s17, 6
      %s25 = sphi 0, %s25
      %s27 = sphi 0, %s25
      %s28 = sphi 0, %s27
      %s42 = sphi 0, %s28
      %s48 = sphi 0, %s50
      %s51 = sphi 0, %s48
      %s52 = sphi 0, %s51
      %s68 = sphi 0, %s52
      %s74 = sphi 0, %s76
      %s77 = sphi 0, %s74
      %s78 = sphi 0, %s77
      %s94 = sphi 0, %s78
    $region4: #{tpu_custom_call.1} parent=1 // loop_header_branch
      %20 = sbr.rel (%p18) target = $region8
    $region5: #{tpu_custom_call.1} parent=1 // loop_body
      %s22 = ssub.s32 %s17, 1
      %s23 = ssub.s32 %s17, 2
      %s24 = sadd.s32 %s17, 1
      %s26 = sadd.s32 %s25, 1
      %p29 = scmp.eq.s32.totalorder %s17, 3
      %p30 = scmp.ne.s32.totalorder %s25, %s27
      %p31 = scmp.eq.s32.totalorder %s17, 0
      %p32 = por %p30, %p31
      %p33 = scmp.ne.s32.totalorder %s25, %s27
      %p34 = scmp.eq.s32.totalorder %s22, 3
      %p35 = por %p33, %p34
      %p36 = scmp.ne.s32.totalorder %s27, %s28
      %p37 = scmp.eq.s32.totalorder %s22, 0
      %p38 = por %p36, %p37
      %p39 = scmp.ne.s32.totalorder %s27, %s28
      %p40 = scmp.eq.s32.totalorder %s23, 3
      %p41 = por %p39, %p40
      %p43 = scmp.ne.s32.totalorder %s28, %s42
      %p44 = scmp.eq.s32.totalorder %s23, 0
      %p45 = por %p43, %p44
      %s46 = ssub.s32 %s17, %s24
      %p47 = scmp.eq.s32.totalorder %s46, 0
      %s49 = sadd.s32 %s48, 1
      %s50 = scalar_select %p47, %s48, %s49
      %p53 = pneg %p47
      %p54 = scmp.eq.s32.totalorder %s17, 3
      %p55 = por %p53, %p54
      %p56 = scmp.ne.s32.totalorder %s48, %s51
      %p57 = scmp.eq.s32.totalorder %s17, 0
      %p58 = por %p56, %p57
      %p59 = scmp.ne.s32.totalorder %s48, %s51
      %p60 = scmp.eq.s32.totalorder %s22, 3
      %p61 = por %p59, %p60
      %p62 = scmp.ne.s32.totalorder %s51, %s52
      %p63 = scmp.eq.s32.totalorder %s22, 0
      %p64 = por %p62, %p63
      %p65 = scmp.ne.s32.totalorder %s51, %s52
      %p66 = scmp.eq.s32.totalorder %s23, 3
      %p67 = por %p65, %p66
      %p69 = scmp.ne.s32.totalorder %s52, %s68
      %p70 = scmp.eq.s32.totalorder %s23, 0
      %p71 = por %p69, %p70
      %s72 = ssub.s32 %s17, %s24
      %p73 = scmp.eq.s32.totalorder %s72, 0
      %s75 = sadd.s32 %s74, 1
      %s76 = scalar_select %p73, %s74, %s75
      %p79 = pneg %p73
      %p80 = scmp.eq.s32.totalorder %s17, 3
      %p81 = por %p79, %p80
      %p82 = scmp.ne.s32.totalorder %s74, %s77
      %p83 = scmp.eq.s32.totalorder %s17, 0
      %p84 = por %p82, %p83
      %p85 = scmp.ne.s32.totalorder %s74, %s77
      %p86 = scmp.eq.s32.totalorder %s22, 3
      %p87 = por %p85, %p86
      %p88 = scmp.ne.s32.totalorder %s77, %s78
      %p89 = scmp.eq.s32.totalorder %s22, 0
      %p90 = por %p88, %p89
      %p91 = scmp.ne.s32.totalorder %s77, %s78
      %p92 = scmp.eq.s32.totalorder %s23, 3
      %p93 = por %p91, %p92
      %p95 = scmp.ne.s32.totalorder %s78, %s94
      %p96 = scmp.eq.s32.totalorder %s23, 0
      %p97 = por %p95, %p96
      %p98 = scmp.le.s32.totalorder 1, %s17
      %p99 = scmp.lt.s32.totalorder %s17, 5
      %p100 = pnand %p98, %p99
      %p101 = pneg %p100
      // Predicated region
      $region9: #{tpu_custom_call.1} parent=5 // pred_check
        _
      $region10: #{tpu_custom_call.1} parent=5 // pred_check_branch
        %103 = sbr.rel (%p100) target = $region12
      $region11: #{tpu_custom_call.1} parent=5 // pred_region
        %s104 = ssub.s32 %s17, 1
        // Predicated region
        $region13: #{tpu_custom_call.1} parent=11 // pred_check
          %p105 = pneg %p38
        $region14: #{tpu_custom_call.1} parent=11 // pred_check_branch
          %107 = sbr.rel (%p105) target = $region16
        $region15: #{tpu_custom_call.1} parent=11 // pred_region
          %s109 = ssub.s32 8192, 8192
          %110 = vsyncadd [#allocation5], %s109
          %s111 = sshll.u32 [#allocation4], 4
          %s112 = int_to_ptr.vmem [resolvable:$true] %s111
          %117 = dma.hbm_to_vmem [thread:$0]  %s1, 8192, %s112, [#allocation5], 256, 256, 16
        $region16: #{tpu_custom_call.1} parent=11 // pred_fallthru
          _
      $region12: #{tpu_custom_call.1} parent=5 // pred_fallthru
        _
      %p118 = scmp.lt.s32.totalorder %s17, 4
      // Predicated region
      $region17: #{tpu_custom_call.1} parent=5 // pred_check
        %p119 = pneg %p118
      $region18: #{tpu_custom_call.1} parent=5 // pred_check_branch
        %121 = sbr.rel (%p119) target = $region20
      $region19: #{tpu_custom_call.1} parent=5 // pred_region
        // Predicated region
        $region21: #{tpu_custom_call.1} parent=19 // pred_check
          %p122 = pneg %p58
        $region22: #{tpu_custom_call.1} parent=19 // pred_check_branch
          %124 = sbr.rel (%p122) target = $region24
        $region23: #{tpu_custom_call.1} parent=19 // pred_region
          %s125 = sand.u32 %s48, 1
          %s126 = scalar_lea.sflag [#allocation8], %s125
          %s127 = sand.u32 %s48, 1
          %s128 = smul.addr %s127, 256
          %s129 = scalar_lea.vmem [#allocation7], %s128
          %s131 = ssub.s32 4096, 4096
          %132 = vsyncadd %s126, %s131
          %s133 = smul.addr %s17, 128
          %s134 = scalar_lea.hbm %s2, %s133
          %s135 = sshll.u32 %s129, 4
          %s136 = int_to_ptr.vmem [resolvable:$true] %s135
          %141 = dma.hbm_to_vmem [thread:$0]  %s134, 4096, %s136, %s126, 512, 128, 8
        $region24: #{tpu_custom_call.1} parent=19 // pred_fallthru
          _
      $region20: #{tpu_custom_call.1} parent=5 // pred_fallthru
        _
      %p142 = scmp.le.s32.totalorder 1, %s17
      %p143 = scmp.lt.s32.totalorder %s17, 5
      %p144 = pnand %p142, %p143
      %p145 = pneg %p144
      // Predicated region
      $region25: #{tpu_custom_call.1} parent=5 // pred_check
        _
      $region26: #{tpu_custom_call.1} parent=5 // pred_check_branch
        %147 = sbr.rel (%p144) target = $region28
      $region27: #{tpu_custom_call.1} parent=5 // pred_region
        %s148 = ssub.s32 %s17, 1
        // Predicated region
        $region29: #{tpu_custom_call.1} parent=27 // pred_check
          %p149 = pneg %p38
        $region30: #{tpu_custom_call.1} parent=27 // pred_check_branch
          %151 = sbr.rel (%p149) target = $region32
        $region31: #{tpu_custom_call.1} parent=27 // pred_region
          %152 = dma.done [#allocation5], 8192
        $region32: #{tpu_custom_call.1} parent=27 // pred_fallthru
          _
        %s153 = sand.u32 %s51, 1
        %s154 = scalar_lea.sflag [#allocation8], %s153
        %s155 = sand.u32 %s51, 1
        %s156 = smul.addr %s155, 256
        %s157 = scalar_lea.vmem [#allocation7], %s156
        // Predicated region
        $region33: #{tpu_custom_call.1} parent=27 // pred_check
          %p158 = pneg %p64
        $region34: #{tpu_custom_call.1} parent=27 // pred_check_branch
          %160 = sbr.rel (%p158) target = $region36
        $region35: #{tpu_custom_call.1} parent=27 // pred_region
          %161 = dma.done %s154, 4096
        $region36: #{tpu_custom_call.1} parent=27 // pred_fallthru
          _
        %p162 = pneg %p38
        %p163 = pneg %p35
        %s164 = sand.u32 %s51, 1
        %s165 = scalar_lea.sflag [#allocation8], %s164
        %s166 = sand.u32 %s51, 1
        %s167 = smul.addr %s166, 256
        %s168 = scalar_lea.vmem [#allocation7], %s167
        %p169 = pneg %p64
        %p170 = pneg %p61
        %p171 = pneg %p90
        %p172 = pneg %p87
        %s173 = sand.u32 %s77, 1
        %s174 = scalar_lea.sflag [#allocation6], %s173
        %s175 = sand.u32 %s77, 1
        %s176 = smul.addr %s175, 256
        %s177 = scalar_lea.vmem [#allocation9], %s176
        %s178 = sld [smem:[#allocation3]]
        %v179 = vld [vmem:[#allocation4] sm:$0xff]
        %v180 = vld [vmem:[#allocation4 + $0x8] sm:$0xff]
        %v181 = vld [vmem:[#allocation4 + $0x10] sm:$0xff]
        %v182 = vld [vmem:[#allocation4 + $0x18] sm:$0xff]
        %v183 = vld [vmem:[#allocation4 + $0x20] sm:$0xff]
        %v184 = vld [vmem:[#allocation4 + $0x28] sm:$0xff]
        %v185 = vld [vmem:[#allocation4 + $0x30] sm:$0xff]
        %v186 = vld [vmem:[#allocation4 + $0x38] sm:$0xff]
        %v187 = vld [vmem:[#allocation4 + $0x40] sm:$0xff]
        %v188 = vld [vmem:[#allocation4 + $0x48] sm:$0xff]
        %v189 = vld [vmem:[#allocation4 + $0x50] sm:$0xff]
        %v190 = vld [vmem:[#allocation4 + $0x58] sm:$0xff]
        %v191 = vld [vmem:[#allocation4 + $0x60] sm:$0xff]
        %v192 = vld [vmem:[#allocation4 + $0x68] sm:$0xff]
        %v193 = vld [vmem:[#allocation4 + $0x70] sm:$0xff]
        %v194 = vld [vmem:[#allocation4 + $0x78] sm:$0xff]
        %v195 = vld [vmem:[#allocation4 + $0x80] sm:$0xff]
        %v196 = vld [vmem:[#allocation4 + $0x88] sm:$0xff]
        %v197 = vld [vmem:[#allocation4 + $0x90] sm:$0xff]
        %v198 = vld [vmem:[#allocation4 + $0x98] sm:$0xff]
        %v199 = vld [vmem:[#allocation4 + $0xa0] sm:$0xff]
        %v200 = vld [vmem:[#allocation4 + $0xa8] sm:$0xff]
        %v201 = vld [vmem:[#allocation4 + $0xb0] sm:$0xff]
        %v202 = vld [vmem:[#allocation4 + $0xb8] sm:$0xff]
        %v203 = vld [vmem:[#allocation4 + $0xc0] sm:$0xff]
        %v204 = vld [vmem:[#allocation4 + $0xc8] sm:$0xff]
        %v205 = vld [vmem:[#allocation4 + $0xd0] sm:$0xff]
        %v206 = vld [vmem:[#allocation4 + $0xd8] sm:$0xff]
        %v207 = vld [vmem:[#allocation4 + $0xe0] sm:$0xff]
        %v208 = vld [vmem:[#allocation4 + $0xe8] sm:$0xff]
        %v209 = vld [vmem:[#allocation4 + $0xf0] sm:$0xff]
        %v210 = vld [vmem:[#allocation4 + $0xf8] sm:$0xff]
        %v211 = vld [vmem:[#allocation4 + $0x100] sm:$0xff]
        %v212 = vld [vmem:[#allocation4 + $0x108] sm:$0xff]
        %v213 = vld [vmem:[#allocation4 + $0x110] sm:$0xff]
        %v214 = vld [vmem:[#allocation4 + $0x118] sm:$0xff]
        %v215 = vld [vmem:[#allocation4 + $0x120] sm:$0xff]
        %v216 = vld [vmem:[#allocation4 + $0x128] sm:$0xff]
        %v217 = vld [vmem:[#allocation4 + $0x130] sm:$0xff]
        %v218 = vld [vmem:[#allocation4 + $0x138] sm:$0xff]
        %v219 = vld [vmem:[#allocation4 + $0x140] sm:$0xff]
        %v220 = vld [vmem:[#allocation4 + $0x148] sm:$0xff]
        %v221 = vld [vmem:[#allocation4 + $0x150] sm:$0xff]
        %v222 = vld [vmem:[#allocation4 + $0x158] sm:$0xff]
        %v223 = vld [vmem:[#allocation4 + $0x160] sm:$0xff]
        %v224 = vld [vmem:[#allocation4 + $0x168] sm:$0xff]
        %v225 = vld [vmem:[#allocation4 + $0x170] sm:$0xff]
        %v226 = vld [vmem:[#allocation4 + $0x178] sm:$0xff]
        %v227 = vld [vmem:[#allocation4 + $0x180] sm:$0xff]
        %v228 = vld [vmem:[#allocation4 + $0x188] sm:$0xff]
        %v229 = vld [vmem:[#allocation4 + $0x190] sm:$0xff]
        %v230 = vld [vmem:[#allocation4 + $0x198] sm:$0xff]
        %v231 = vld [vmem:[#allocation4 + $0x1a0] sm:$0xff]
        %v232 = vld [vmem:[#allocation4 + $0x1a8] sm:$0xff]
        %v233 = vld [vmem:[#allocation4 + $0x1b0] sm:$0xff]
        %v234 = vld [vmem:[#allocation4 + $0x1b8] sm:$0xff]
        %v235 = vld [vmem:[#allocation4 + $0x1c0] sm:$0xff]
        %v236 = vld [vmem:[#allocation4 + $0x1c8] sm:$0xff]
        %v237 = vld [vmem:[#allocation4 + $0x1d0] sm:$0xff]
        %v238 = vld [vmem:[#allocation4 + $0x1d8] sm:$0xff]
        %v239 = vld [vmem:[#allocation4 + $0x1e0] sm:$0xff]
        %v240 = vld [vmem:[#allocation4 + $0x1e8] sm:$0xff]
        %v241 = vld [vmem:[#allocation4 + $0x1f0] sm:$0xff]
        %v242 = vld [vmem:[#allocation4 + $0x1f8] sm:$0xff]
        %v243 = vld [vmem:[%s157] sm:$0xff]
        %v244 = vld [vmem:[%s157 + $0x8] sm:$0xff]
        %v245 = vld [vmem:[%s157 + $0x10] sm:$0xff]
        %v246 = vld [vmem:[%s157 + $0x18] sm:$0xff]
        %v247 = vld [vmem:[%s157 + $0x20] sm:$0xff]
        %v248 = vld [vmem:[%s157 + $0x28] sm:$0xff]
        %v249 = vld [vmem:[%s157 + $0x30] sm:$0xff]
        %v250 = vld [vmem:[%s157 + $0x38] sm:$0xff]
        %v251 = vld [vmem:[%s157 + $0x40] sm:$0xff]
        %v252 = vld [vmem:[%s157 + $0x48] sm:$0xff]
        %v253 = vld [vmem:[%s157 + $0x50] sm:$0xff]
        %v254 = vld [vmem:[%s157 + $0x58] sm:$0xff]
        %v255 = vld [vmem:[%s157 + $0x60] sm:$0xff]
        %v256 = vld [vmem:[%s157 + $0x68] sm:$0xff]
        %v257 = vld [vmem:[%s157 + $0x70] sm:$0xff]
        %v258 = vld [vmem:[%s157 + $0x78] sm:$0xff]
        %v259 = vld [vmem:[%s157 + $0x80] sm:$0xff]
        %v260 = vld [vmem:[%s157 + $0x88] sm:$0xff]
        %v261 = vld [vmem:[%s157 + $0x90] sm:$0xff]
        %v262 = vld [vmem:[%s157 + $0x98] sm:$0xff]
        %v263 = vld [vmem:[%s157 + $0xa0] sm:$0xff]
        %v264 = vld [vmem:[%s157 + $0xa8] sm:$0xff]
        %v265 = vld [vmem:[%s157 + $0xb0] sm:$0xff]
        %v266 = vld [vmem:[%s157 + $0xb8] sm:$0xff]
        %v267 = vld [vmem:[%s157 + $0xc0] sm:$0xff]
        %v268 = vld [vmem:[%s157 + $0xc8] sm:$0xff]
        %v269 = vld [vmem:[%s157 + $0xd0] sm:$0xff]
        %v270 = vld [vmem:[%s157 + $0xd8] sm:$0xff]
        %v271 = vld [vmem:[%s157 + $0xe0] sm:$0xff]
        %v272 = vld [vmem:[%s157 + $0xe8] sm:$0xff]
        %v273 = vld [vmem:[%s157 + $0xf0] sm:$0xff]
        %v274 = vld [vmem:[%s157 + $0xf8] sm:$0xff]
        %275 = vmatprep.subr.mxu0 0.0
        %276 = vmatpush1.msra.mxu0 %v258
        %277 = vmatprep.subr.mxu0 0.0
        %278 = vmatpush1.msra.mxu0 %v257
        %279 = vmatprep.subr.mxu0 0.0
        %280 = vmatpush1.msra.mxu0 %v256
        %281 = vmatprep.subr.mxu0 0.0
        %282 = vmatpush1.msra.mxu0 %v255
        %283 = vmatprep.subr.mxu0 0.0
        %284 = vmatpush1.msra.mxu0 %v254
        %285 = vmatprep.subr.mxu0 0.0
        %286 = vmatpush1.msra.mxu0 %v253
        %287 = vmatprep.subr.mxu0 0.0
        %288 = vmatpush1.msra.mxu0 %v252
        %289 = vmatprep.subr.mxu0 0.0
        %290 = vmatpush1.msra.mxu0 %v251
        %291 = vmatprep.subr.mxu0 0.0
        %292 = vmatpush1.msra.mxu0 %v250
        %293 = vmatprep.subr.mxu0 0.0
        %294 = vmatpush1.msra.mxu0 %v249
        %295 = vmatprep.subr.mxu0 0.0
        %296 = vmatpush1.msra.mxu0 %v248
        %297 = vmatprep.subr.mxu0 0.0
        %298 = vmatpush1.msra.mxu0 %v247
        %299 = vmatprep.subr.mxu0 0.0
        %300 = vmatpush1.msra.mxu0 %v246
        %301 = vmatprep.subr.mxu0 0.0
        %302 = vmatpush1.msra.mxu0 %v245
        %303 = vmatprep.subr.mxu0 0.0
        %304 = vmatpush1.msra.mxu0 %v244
        %305 = vmatprep.subr.mxu0 0.0
        %306 = vmatpush1.msra.mxu0 %v243
        %307 = vmatprep.subr.mxu0 0.0
        %308 = vmatpush2.msra.mxu0 %v274
        %309 = vmatprep.subr.mxu0 0.0
        %310 = vmatpush2.msra.mxu0 %v273
        %311 = vmatprep.subr.mxu0 0.0
        %312 = vmatpush2.msra.mxu0 %v272
        %313 = vmatprep.subr.mxu0 0.0
        %314 = vmatpush2.msra.mxu0 %v271
        %315 = vmatprep.subr.mxu0 0.0
        %316 = vmatpush2.msra.mxu0 %v270
        %317 = vmatprep.subr.mxu0 0.0
        %318 = vmatpush2.msra.mxu0 %v269
        %319 = vmatprep.subr.mxu0 0.0
        %320 = vmatpush2.msra.mxu0 %v268
        %321 = vmatprep.subr.mxu0 0.0
        %322 = vmatpush2.msra.mxu0 %v267
        %323 = vmatprep.subr.mxu0 0.0
        %324 = vmatpush2.msra.mxu0 %v266
        %325 = vmatprep.subr.mxu0 0.0
        %326 = vmatpush2.msra.mxu0 %v265
        %327 = vmatprep.subr.mxu0 0.0
        %328 = vmatpush2.msra.mxu0 %v264
        %329 = vmatprep.subr.mxu0 0.0
        %330 = vmatpush2.msra.mxu0 %v263
        %331 = vmatprep.subr.mxu0 0.0
        %332 = vmatpush2.msra.mxu0 %v262
        %333 = vmatprep.subr.mxu0 0.0
        %334 = vmatpush2.msra.mxu0 %v261
        %335 = vmatprep.subr.mxu0 0.0
        %336 = vmatpush2.msra.mxu0 %v260
        %337 = vmatprep.subr.mxu0 0.0
        %338 = vmatpush2.msra.mxu0 %v259
        %339 = vmatprep.mubr.f32.mxu0 %v180
        %340 = vmatmul.mubr.f32.gmra.mxu0 %v179
        %v341 = vpop.f32.mrf.mxu0
        %v342 = vadd.f32 0.0, %v341
        %v343 = vpop.f32.mrf.mxu0
        %344 = vmatprep.mubr.f32.mxu0 %v182
        %345 = vmatmul.mubr.f32.gmra.mxu0 %v181
        %v346 = vpop.f32.mrf.mxu0
        %v347 = vadd.f32 0.0, %v346
        %v348 = vpop.f32.mrf.mxu0
        %349 = vmatprep.mubr.f32.mxu0 %v184
        %350 = vmatmul.mubr.f32.gmra.mxu0 %v183
        %v351 = vpop.f32.mrf.mxu0
        %v352 = vadd.f32 0.0, %v351
        %v353 = vpop.f32.mrf.mxu0
        %354 = vmatprep.mubr.f32.mxu0 %v186
        %355 = vmatmul.mubr.f32.gmra.mxu0 %v185
        %v356 = vpop.f32.mrf.mxu0
        %v357 = vadd.f32 0.0, %v356
        %v358 = vpop.f32.mrf.mxu0
        %359 = vmatprep.mubr.f32.mxu0 %v188
        %360 = vmatmul.mubr.f32.gmra.mxu0 %v187
        %v361 = vpop.f32.mrf.mxu0
        %v362 = vadd.f32 0.0, %v361
        %v363 = vpop.f32.mrf.mxu0
        %364 = vmatprep.mubr.f32.mxu0 %v190
        %365 = vmatmul.mubr.f32.gmra.mxu0 %v189
        %v366 = vpop.f32.mrf.mxu0
        %v367 = vadd.f32 0.0, %v366
        %v368 = vpop.f32.mrf.mxu0
        %369 = vmatprep.mubr.f32.mxu0 %v192
        %370 = vmatmul.mubr.f32.gmra.mxu0 %v191
        %v371 = vpop.f32.mrf.mxu0
        %v372 = vadd.f32 0.0, %v371
        %v373 = vpop.f32.mrf.mxu0
        %374 = vmatprep.mubr.f32.mxu0 %v194
        %375 = vmatmul.mubr.f32.gmra.mxu0 %v193
        %v376 = vpop.f32.mrf.mxu0
        %v377 = vadd.f32 0.0, %v376
        %v378 = vpop.f32.mrf.mxu0
        %379 = vmatprep.mubr.f32.mxu0 %v196
        %380 = vmatmul.mubr.f32.gmra.mxu0 %v195
        %v381 = vpop.f32.mrf.mxu0
        %v382 = vadd.f32 0.0, %v381
        %v383 = vpop.f32.mrf.mxu0
        %384 = vmatprep.mubr.f32.mxu0 %v198
        %385 = vmatmul.mubr.f32.gmra.mxu0 %v197
        %v386 = vpop.f32.mrf.mxu0
        %v387 = vadd.f32 0.0, %v386
        %v388 = vpop.f32.mrf.mxu0
        %389 = vmatprep.mubr.f32.mxu0 %v200
        %390 = vmatmul.mubr.f32.gmra.mxu0 %v199
        %v391 = vpop.f32.mrf.mxu0
        %v392 = vadd.f32 0.0, %v391
        %v393 = vpop.f32.mrf.mxu0
        %394 = vmatprep.mubr.f32.mxu0 %v202
        %395 = vmatmul.mubr.f32.gmra.mxu0 %v201
        %v396 = vpop.f32.mrf.mxu0
        %v397 = vadd.f32 0.0, %v396
        %v398 = vpop.f32.mrf.mxu0
        %399 = vmatprep.mubr.f32.mxu0 %v204
        %400 = vmatmul.mubr.f32.gmra.mxu0 %v203
        %v401 = vpop.f32.mrf.mxu0
        %v402 = vadd.f32 0.0, %v401
        %v403 = vpop.f32.mrf.mxu0
        %404 = vmatprep.mubr.f32.mxu0 %v206
        %405 = vmatmul.mubr.f32.gmra.mxu0 %v205
        %v406 = vpop.f32.mrf.mxu0
        %v407 = vadd.f32 0.0, %v406
        %v408 = vpop.f32.mrf.mxu0
        %409 = vmatprep.mubr.f32.mxu0 %v208
        %410 = vmatmul.mubr.f32.gmra.mxu0 %v207
        %v411 = vpop.f32.mrf.mxu0
        %v412 = vadd.f32 0.0, %v411
        %v413 = vpop.f32.mrf.mxu0
        %414 = vmatprep.mubr.f32.mxu0 %v210
        %415 = vmatmul.mubr.f32.gmra.mxu0 %v209
        %v416 = vpop.f32.mrf.mxu0
        %v417 = vadd.f32 0.0, %v416
        %v418 = vpop.f32.mrf.mxu0
        %419 = vmatprep.mubr.f32.mxu0 %v212
        %420 = vmatmul.mubr.f32.gmra.mxu0 %v211
        %v421 = vpop.f32.mrf.mxu0
        %v422 = vadd.f32 0.0, %v421
        %v423 = vpop.f32.mrf.mxu0
        %424 = vmatprep.mubr.f32.mxu0 %v214
        %425 = vmatmul.mubr.f32.gmra.mxu0 %v213
        %v426 = vpop.f32.mrf.mxu0
        %v427 = vadd.f32 0.0, %v426
        %v428 = vpop.f32.mrf.mxu0
        %429 = vmatprep.mubr.f32.mxu0 %v216
        %430 = vmatmul.mubr.f32.gmra.mxu0 %v215
        %v431 = vpop.f32.mrf.mxu0
        %v432 = vadd.f32 0.0, %v431
        %v433 = vpop.f32.mrf.mxu0
        %434 = vmatprep.mubr.f32.mxu0 %v218
        %435 = vmatmul.mubr.f32.gmra.mxu0 %v217
        %v436 = vpop.f32.mrf.mxu0
        %v437 = vadd.f32 0.0, %v436
        %v438 = vpop.f32.mrf.mxu0
        %439 = vmatprep.mubr.f32.mxu0 %v220
        %440 = vmatmul.mubr.f32.gmra.mxu0 %v219
        %v441 = vpop.f32.mrf.mxu0
        %v442 = vadd.f32 0.0, %v441
        %v443 = vpop.f32.mrf.mxu0
        %444 = vmatprep.mubr.f32.mxu0 %v222
        %445 = vmatmul.mubr.f32.gmra.mxu0 %v221
        %v446 = vpop.f32.mrf.mxu0
        %v447 = vadd.f32 0.0, %v446
        %v448 = vpop.f32.mrf.mxu0
        %449 = vmatprep.mubr.f32.mxu0 %v224
        %450 = vmatmul.mubr.f32.gmra.mxu0 %v223
        %v451 = vpop.f32.mrf.mxu0
        %v452 = vadd.f32 0.0, %v451
        %v453 = vpop.f32.mrf.mxu0
        %454 = vmatprep.mubr.f32.mxu0 %v226
        %455 = vmatmul.mubr.f32.gmra.mxu0 %v225
        %v456 = vpop.f32.mrf.mxu0
        %v457 = vadd.f32 0.0, %v456
        %v458 = vpop.f32.mrf.mxu0
        %459 = vmatprep.mubr.f32.mxu0 %v228
        %460 = vmatmul.mubr.f32.gmra.mxu0 %v227
        %v461 = vpop.f32.mrf.mxu0
        %v462 = vadd.f32 0.0, %v461
        %v463 = vpop.f32.mrf.mxu0
        %464 = vmatprep.mubr.f32.mxu0 %v230
        %465 = vmatmul.mubr.f32.gmra.mxu0 %v229
        %v466 = vpop.f32.mrf.mxu0
        %v467 = vadd.f32 0.0, %v466
        %v468 = vpop.f32.mrf.mxu0
        %469 = vmatprep.mubr.f32.mxu0 %v232
        %470 = vmatmul.mubr.f32.gmra.mxu0 %v231
        %v471 = vpop.f32.mrf.mxu0
        %v472 = vadd.f32 0.0, %v471
        %v473 = vpop.f32.mrf.mxu0
        %474 = vmatprep.mubr.f32.mxu0 %v234
        %475 = vmatmul.mubr.f32.gmra.mxu0 %v233
        %v476 = vpop.f32.mrf.mxu0
        %v477 = vadd.f32 0.0, %v476
        %v478 = vpop.f32.mrf.mxu0
        %479 = vmatprep.mubr.f32.mxu0 %v236
        %480 = vmatmul.mubr.f32.gmra.mxu0 %v235
        %v481 = vpop.f32.mrf.mxu0
        %v482 = vadd.f32 0.0, %v481
        %v483 = vpop.f32.mrf.mxu0
        %484 = vmatprep.mubr.f32.mxu0 %v238
        %485 = vmatmul.mubr.f32.gmra.mxu0 %v237
        %v486 = vpop.f32.mrf.mxu0
        %v487 = vadd.f32 0.0, %v486
        %v488 = vpop.f32.mrf.mxu0
        %489 = vmatprep.mubr.f32.mxu0 %v240
        %490 = vmatmul.mubr.f32.gmra.mxu0 %v239
        %v491 = vpop.f32.mrf.mxu0
        %v492 = vadd.f32 0.0, %v491
        %v493 = vpop.f32.mrf.mxu0
        %494 = vmatprep.mubr.f32.mxu0 %v242
        %495 = vmatmul.mubr.f32.gmra.mxu0 %v241
        %v496 = vpop.f32.mrf.mxu0
        %v497 = vadd.f32 0.0, %v496
        %v498 = vpop.f32.mrf.mxu0
        %499 = vdwg.mxu0
        %v500 = vstv %s178
        %v501 = vmul.f32 %v500, %v342
        %v502 = vmul.f32 %v500, %v347
        %v503 = vmul.f32 %v500, %v352
        %v504 = vmul.f32 %v500, %v357
        %v505 = vmul.f32 %v500, %v362
        %v506 = vmul.f32 %v500, %v367
        %v507 = vmul.f32 %v500, %v372
        %v508 = vmul.f32 %v500, %v377
        %v509 = vmul.f32 %v500, %v382
        %v510 = vmul.f32 %v500, %v387
        %v511 = vmul.f32 %v500, %v392
        %v512 = vmul.f32 %v500, %v397
        %v513 = vmul.f32 %v500, %v402
        %v514 = vmul.f32 %v500, %v407
        %v515 = vmul.f32 %v500, %v412
        %v516 = vmul.f32 %v500, %v417
        %v517 = vmul.f32 %v500, %v422
        %v518 = vmul.f32 %v500, %v427
        %v519 = vmul.f32 %v500, %v432
        %v520 = vmul.f32 %v500, %v437
        %v521 = vmul.f32 %v500, %v442
        %v522 = vmul.f32 %v500, %v447
        %v523 = vmul.f32 %v500, %v452
        %v524 = vmul.f32 %v500, %v457
        %v525 = vmul.f32 %v500, %v462
        %v526 = vmul.f32 %v500, %v467
        %v527 = vmul.f32 %v500, %v472
        %v528 = vmul.f32 %v500, %v477
        %v529 = vmul.f32 %v500, %v482
        %v530 = vmul.f32 %v500, %v487
        %v531 = vmul.f32 %v500, %v492
        %v532 = vmul.f32 %v500, %v497
        %v533 = vadd.f32 %v243, %v501
        %v534 = vadd.f32 %v244, %v502
        %v535 = vadd.f32 %v245, %v503
        %v536 = vadd.f32 %v246, %v504
        %v537 = vadd.f32 %v247, %v505
        %v538 = vadd.f32 %v248, %v506
        %v539 = vadd.f32 %v249, %v507
        %v540 = vadd.f32 %v250, %v508
        %v541 = vadd.f32 %v251, %v509
        %v542 = vadd.f32 %v252, %v510
        %v543 = vadd.f32 %v253, %v511
        %v544 = vadd.f32 %v254, %v512
        %v545 = vadd.f32 %v255, %v513
        %v546 = vadd.f32 %v256, %v514
        %v547 = vadd.f32 %v257, %v515
        %v548 = vadd.f32 %v258, %v516
        %v549 = vadd.f32 %v259, %v517
        %v550 = vadd.f32 %v260, %v518
        %v551 = vadd.f32 %v261, %v519
        %v552 = vadd.f32 %v262, %v520
        %v553 = vadd.f32 %v263, %v521
        %v554 = vadd.f32 %v264, %v522
        %v555 = vadd.f32 %v265, %v523
        %v556 = vadd.f32 %v266, %v524
        %v557 = vadd.f32 %v267, %v525
        %v558 = vadd.f32 %v268, %v526
        %v559 = vadd.f32 %v269, %v527
        %v560 = vadd.f32 %v270, %v528
        %v561 = vadd.f32 %v271, %v529
        %v562 = vadd.f32 %v272, %v530
        %v563 = vadd.f32 %v273, %v531
        %v564 = vadd.f32 %v274, %v532
        %565 = vmatprep.subr.mxu0 0.0
        %566 = vmatpush1.msra.mxu0 %v516
        %567 = vmatprep.subr.mxu0 0.0
        %568 = vmatpush1.msra.mxu0 %v515
        %569 = vmatprep.subr.mxu0 0.0
        %570 = vmatpush1.msra.mxu0 %v514
        %571 = vmatprep.subr.mxu0 0.0
        %572 = vmatpush1.msra.mxu0 %v513
        %573 = vmatprep.subr.mxu0 0.0
        %574 = vmatpush1.msra.mxu0 %v512
        %575 = vmatprep.subr.mxu0 0.0
        %576 = vmatpush1.msra.mxu0 %v511
        %577 = vmatprep.subr.mxu0 0.0
        %578 = vmatpush1.msra.mxu0 %v510
        %579 = vmatprep.subr.mxu0 0.0
        %580 = vmatpush1.msra.mxu0 %v509
        %581 = vmatprep.subr.mxu0 0.0
        %582 = vmatpush1.msra.mxu0 %v508
        %583 = vmatprep.subr.mxu0 0.0
        %584 = vmatpush1.msra.mxu0 %v507
        %585 = vmatprep.subr.mxu0 0.0
        %586 = vmatpush1.msra.mxu0 %v506
        %587 = vmatprep.subr.mxu0 0.0
        %588 = vmatpush1.msra.mxu0 %v505
        %589 = vmatprep.subr.mxu0 0.0
        %590 = vmatpush1.msra.mxu0 %v504
        %591 = vmatprep.subr.mxu0 0.0
        %592 = vmatpush1.msra.mxu0 %v503
        %593 = vmatprep.subr.mxu0 0.0
        %594 = vmatpush1.msra.mxu0 %v502
        %595 = vmatprep.subr.mxu0 0.0
        %596 = vmatpush1.msra.mxu0 %v501
        %597 = vmatprep.subr.mxu0 0.0
        %598 = vmatpush2.msra.mxu0 %v532
        %599 = vmatprep.subr.mxu0 0.0
        %600 = vmatpush2.msra.mxu0 %v531
        %601 = vmatprep.subr.mxu0 0.0
        %602 = vmatpush2.msra.mxu0 %v530
        %603 = vmatprep.subr.mxu0 0.0
        %604 = vmatpush2.msra.mxu0 %v529
        %605 = vmatprep.subr.mxu0 0.0
        %606 = vmatpush2.msra.mxu0 %v528
        %607 = vmatprep.subr.mxu0 0.0
        %608 = vmatpush2.msra.mxu0 %v527
        %609 = vmatprep.subr.mxu0 0.0
        %610 = vmatpush2.msra.mxu0 %v526
        %611 = vmatprep.subr.mxu0 0.0
        %612 = vmatpush2.msra.mxu0 %v525
        %613 = vmatprep.subr.mxu0 0.0
        %614 = vmatpush2.msra.mxu0 %v524
        %615 = vmatprep.subr.mxu0 0.0
        %616 = vmatpush2.msra.mxu0 %v523
        %617 = vmatprep.subr.mxu0 0.0
        %618 = vmatpush2.msra.mxu0 %v522
        %619 = vmatprep.subr.mxu0 0.0
        %620 = vmatpush2.msra.mxu0 %v521
        %621 = vmatprep.subr.mxu0 0.0
        %622 = vmatpush2.msra.mxu0 %v520
        %623 = vmatprep.subr.mxu0 0.0
        %624 = vmatpush2.msra.mxu0 %v519
        %625 = vmatprep.subr.mxu0 0.0
        %626 = vmatpush2.msra.mxu0 %v518
        %627 = vmatprep.subr.mxu0 0.0
        %628 = vmatpush2.msra.mxu0 %v517
        %629 = vmatprep.mubr.f32.mxu0 %v180
        %630 = vmatmul.mubr.f32.gmra.mxu0 %v179
        %v631 = vpop.f32.mrf.mxu0
        %v632 = vadd.f32 0.0, %v631
        %v633 = vpop.f32.mrf.mxu0
        %634 = vmatprep.mubr.f32.mxu0 %v182
        %635 = vmatmul.mubr.f32.gmra.mxu0 %v181
        %v636 = vpop.f32.mrf.mxu0
        %v637 = vadd.f32 0.0, %v636
        %v638 = vpop.f32.mrf.mxu0
        %639 = vmatprep.mubr.f32.mxu0 %v184
        %640 = vmatmul.mubr.f32.gmra.mxu0 %v183
        %v641 = vpop.f32.mrf.mxu0
        %v642 = vadd.f32 0.0, %v641
        %v643 = vpop.f32.mrf.mxu0
        %644 = vmatprep.mubr.f32.mxu0 %v186
        %645 = vmatmul.mubr.f32.gmra.mxu0 %v185
        %v646 = vpop.f32.mrf.mxu0
        %v647 = vadd.f32 0.0, %v646
        %v648 = vpop.f32.mrf.mxu0
        %649 = vmatprep.mubr.f32.mxu0 %v188
        %650 = vmatmul.mubr.f32.gmra.mxu0 %v187
        %v651 = vpop.f32.mrf.mxu0
        %v652 = vadd.f32 0.0, %v651
        %v653 = vpop.f32.mrf.mxu0
        %654 = vmatprep.mubr.f32.mxu0 %v190
        %655 = vmatmul.mubr.f32.gmra.mxu0 %v189
        %v656 = vpop.f32.mrf.mxu0
        %v657 = vadd.f32 0.0, %v656
        %v658 = vpop.f32.mrf.mxu0
        %659 = vmatprep.mubr.f32.mxu0 %v192
        %660 = vmatmul.mubr.f32.gmra.mxu0 %v191
        %v661 = vpop.f32.mrf.mxu0
        %v662 = vadd.f32 0.0, %v661
        %v663 = vpop.f32.mrf.mxu0
        %664 = vmatprep.mubr.f32.mxu0 %v194
        %665 = vmatmul.mubr.f32.gmra.mxu0 %v193
        %v666 = vpop.f32.mrf.mxu0
        %v667 = vadd.f32 0.0, %v666
        %v668 = vpop.f32.mrf.mxu0
        %669 = vmatprep.mubr.f32.mxu0 %v196
        %670 = vmatmul.mubr.f32.gmra.mxu0 %v195
        %v671 = vpop.f32.mrf.mxu0
        %v672 = vadd.f32 0.0, %v671
        %v673 = vpop.f32.mrf.mxu0
        %674 = vmatprep.mubr.f32.mxu0 %v198
        %675 = vmatmul.mubr.f32.gmra.mxu0 %v197
        %v676 = vpop.f32.mrf.mxu0
        %v677 = vadd.f32 0.0, %v676
        %v678 = vpop.f32.mrf.mxu0
        %679 = vmatprep.mubr.f32.mxu0 %v200
        %680 = vmatmul.mubr.f32.gmra.mxu0 %v199
        %v681 = vpop.f32.mrf.mxu0
        %v682 = vadd.f32 0.0, %v681
        %v683 = vpop.f32.mrf.mxu0
        %684 = vmatprep.mubr.f32.mxu0 %v202
        %685 = vmatmul.mubr.f32.gmra.mxu0 %v201
        %v686 = vpop.f32.mrf.mxu0
        %v687 = vadd.f32 0.0, %v686
        %v688 = vpop.f32.mrf.mxu0
        %689 = vmatprep.mubr.f32.mxu0 %v204
        %690 = vmatmul.mubr.f32.gmra.mxu0 %v203
        %v691 = vpop.f32.mrf.mxu0
        %v692 = vadd.f32 0.0, %v691
        %v693 = vpop.f32.mrf.mxu0
        %694 = vmatprep.mubr.f32.mxu0 %v206
        %695 = vmatmul.mubr.f32.gmra.mxu0 %v205
        %v696 = vpop.f32.mrf.mxu0
        %v697 = vadd.f32 0.0, %v696
        %v698 = vpop.f32.mrf.mxu0
        %699 = vmatprep.mubr.f32.mxu0 %v208
        %700 = vmatmul.mubr.f32.gmra.mxu0 %v207
        %v701 = vpop.f32.mrf.mxu0
        %v702 = vadd.f32 0.0, %v701
        %v703 = vpop.f32.mrf.mxu0
        %704 = vmatprep.mubr.f32.mxu0 %v210
        %705 = vmatmul.mubr.f32.gmra.mxu0 %v209
        %v706 = vpop.f32.mrf.mxu0
        %v707 = vadd.f32 0.0, %v706
        %v708 = vpop.f32.mrf.mxu0
        %709 = vmatprep.mubr.f32.mxu0 %v212
        %710 = vmatmul.mubr.f32.gmra.mxu0 %v211
        %v711 = vpop.f32.mrf.mxu0
        %v712 = vadd.f32 0.0, %v711
        %v713 = vpop.f32.mrf.mxu0
        %714 = vmatprep.mubr.f32.mxu0 %v214
        %715 = vmatmul.mubr.f32.gmra.mxu0 %v213
        %v716 = vpop.f32.mrf.mxu0
        %v717 = vadd.f32 0.0, %v716
        %v718 = vpop.f32.mrf.mxu0
        %719 = vmatprep.mubr.f32.mxu0 %v216
        %720 = vmatmul.mubr.f32.gmra.mxu0 %v215
        %v721 = vpop.f32.mrf.mxu0
        %v722 = vadd.f32 0.0, %v721
        %v723 = vpop.f32.mrf.mxu0
        %724 = vmatprep.mubr.f32.mxu0 %v218
        %725 = vmatmul.mubr.f32.gmra.mxu0 %v217
        %v726 = vpop.f32.mrf.mxu0
        %v727 = vadd.f32 0.0, %v726
        %v728 = vpop.f32.mrf.mxu0
        %729 = vmatprep.mubr.f32.mxu0 %v220
        %730 = vmatmul.mubr.f32.gmra.mxu0 %v219
        %v731 = vpop.f32.mrf.mxu0
        %v732 = vadd.f32 0.0, %v731
        %v733 = vpop.f32.mrf.mxu0
        %734 = vmatprep.mubr.f32.mxu0 %v222
        %735 = vmatmul.mubr.f32.gmra.mxu0 %v221
        %v736 = vpop.f32.mrf.mxu0
        %v737 = vadd.f32 0.0, %v736
        %v738 = vpop.f32.mrf.mxu0
        %739 = vmatprep.mubr.f32.mxu0 %v224
        %740 = vmatmul.mubr.f32.gmra.mxu0 %v223
        %v741 = vpop.f32.mrf.mxu0
        %v742 = vadd.f32 0.0, %v741
        %v743 = vpop.f32.mrf.mxu0
        %744 = vmatprep.mubr.f32.mxu0 %v226
        %745 = vmatmul.mubr.f32.gmra.mxu0 %v225
        %v746 = vpop.f32.mrf.mxu0
        %v747 = vadd.f32 0.0, %v746
        %v748 = vpop.f32.mrf.mxu0
        %749 = vmatprep.mubr.f32.mxu0 %v228
        %750 = vmatmul.mubr.f32.gmra.mxu0 %v227
        %v751 = vpop.f32.mrf.mxu0
        %v752 = vadd.f32 0.0, %v751
        %v753 = vpop.f32.mrf.mxu0
        %754 = vmatprep.mubr.f32.mxu0 %v230
        %755 = vmatmul.mubr.f32.gmra.mxu0 %v229
        %v756 = vpop.f32.mrf.mxu0
        %v757 = vadd.f32 0.0, %v756
        %v758 = vpop.f32.mrf.mxu0
        %759 = vmatprep.mubr.f32.mxu0 %v232
        %760 = vmatmul.mubr.f32.gmra.mxu0 %v231
        %v761 = vpop.f32.mrf.mxu0
        %v762 = vadd.f32 0.0, %v761
        %v763 = vpop.f32.mrf.mxu0
        %764 = vmatprep.mubr.f32.mxu0 %v234
        %765 = vmatmul.mubr.f32.gmra.mxu0 %v233
        %v766 = vpop.f32.mrf.mxu0
        %v767 = vadd.f32 0.0, %v766
        %v768 = vpop.f32.mrf.mxu0
        %769 = vmatprep.mubr.f32.mxu0 %v236
        %770 = vmatmul.mubr.f32.gmra.mxu0 %v235
        %v771 = vpop.f32.mrf.mxu0
        %v772 = vadd.f32 0.0, %v771
        %v773 = vpop.f32.mrf.mxu0
        %774 = vmatprep.mubr.f32.mxu0 %v238
        %775 = vmatmul.mubr.f32.gmra.mxu0 %v237
        %v776 = vpop.f32.mrf.mxu0
        %v777 = vadd.f32 0.0, %v776
        %v778 = vpop.f32.mrf.mxu0
        %779 = vmatprep.mubr.f32.mxu0 %v240
        %780 = vmatmul.mubr.f32.gmra.mxu0 %v239
        %v781 = vpop.f32.mrf.mxu0
        %v782 = vadd.f32 0.0, %v781
        %v783 = vpop.f32.mrf.mxu0
        %784 = vmatprep.mubr.f32.mxu0 %v242
        %785 = vmatmul.mubr.f32.gmra.mxu0 %v241
        %v786 = vpop.f32.mrf.mxu0
        %v787 = vadd.f32 0.0, %v786
        %v788 = vpop.f32.mrf.mxu0
        %789 = vdwg.mxu0
        %v790 = vmul.f32 %v500, %v632
        %v791 = vmul.f32 %v500, %v637
        %v792 = vmul.f32 %v500, %v642
        %v793 = vmul.f32 %v500, %v647
        %v794 = vmul.f32 %v500, %v652
        %v795 = vmul.f32 %v500, %v657
        %v796 = vmul.f32 %v500, %v662
        %v797 = vmul.f32 %v500, %v667
        %v798 = vmul.f32 %v500, %v672
        %v799 = vmul.f32 %v500, %v677
        %v800 = vmul.f32 %v500, %v682
        %v801 = vmul.f32 %v500, %v687
        %v802 = vmul.f32 %v500, %v692
        %v803 = vmul.f32 %v500, %v697
        %v804 = vmul.f32 %v500, %v702
        %v805 = vmul.f32 %v500, %v707
        %v806 = vmul.f32 %v500, %v712
        %v807 = vmul.f32 %v500, %v717
        %v808 = vmul.f32 %v500, %v722
        %v809 = vmul.f32 %v500, %v727
        %v810 = vmul.f32 %v500, %v732
        %v811 = vmul.f32 %v500, %v737
        %v812 = vmul.f32 %v500, %v742
        %v813 = vmul.f32 %v500, %v747
        %v814 = vmul.f32 %v500, %v752
        %v815 = vmul.f32 %v500, %v757
        %v816 = vmul.f32 %v500, %v762
        %v817 = vmul.f32 %v500, %v767
        %v818 = vmul.f32 %v500, %v772
        %v819 = vmul.f32 %v500, %v777
        %v820 = vmul.f32 %v500, %v782
        %v821 = vmul.f32 %v500, %v787
        %v822 = vadd.f32 %v533, %v790
        %v823 = vadd.f32 %v534, %v791
        %v824 = vadd.f32 %v535, %v792
        %v825 = vadd.f32 %v536, %v793
        %v826 = vadd.f32 %v537, %v794
        %v827 = vadd.f32 %v538, %v795
        %v828 = vadd.f32 %v539, %v796
        %v829 = vadd.f32 %v540, %v797
        %v830 = vadd.f32 %v541, %v798
        %v831 = vadd.f32 %v542, %v799
        %v832 = vadd.f32 %v543, %v800
        %v833 = vadd.f32 %v544, %v801
        %v834 = vadd.f32 %v545, %v802
        %v835 = vadd.f32 %v546, %v803
        %v836 = vadd.f32 %v547, %v804
        %v837 = vadd.f32 %v548, %v805
        %v838 = vadd.f32 %v549, %v806
        %v839 = vadd.f32 %v550, %v807
        %v840 = vadd.f32 %v551, %v808
        %v841 = vadd.f32 %v552, %v809
        %v842 = vadd.f32 %v553, %v810
        %v843 = vadd.f32 %v554, %v811
        %v844 = vadd.f32 %v555, %v812
        %v845 = vadd.f32 %v556, %v813
        %v846 = vadd.f32 %v557, %v814
        %v847 = vadd.f32 %v558, %v815
        %v848 = vadd.f32 %v559, %v816
        %v849 = vadd.f32 %v560, %v817
        %v850 = vadd.f32 %v561, %v818
        %v851 = vadd.f32 %v562, %v819
        %v852 = vadd.f32 %v563, %v820
        %v853 = vadd.f32 %v564, %v821
        %854 = vmatprep.subr.mxu0 0.0
        %855 = vmatpush1.msra.mxu0 %v805
        %856 = vmatprep.subr.mxu0 0.0
        %857 = vmatpush1.msra.mxu0 %v804
        %858 = vmatprep.subr.mxu0 0.0
        %859 = vmatpush1.msra.mxu0 %v803
        %860 = vmatprep.subr.mxu0 0.0
        %861 = vmatpush1.msra.mxu0 %v802
        %862 = vmatprep.subr.mxu0 0.0
        %863 = vmatpush1.msra.mxu0 %v801
        %864 = vmatprep.subr.mxu0 0.0
        %865 = vmatpush1.msra.mxu0 %v800
        %866 = vmatprep.subr.mxu0 0.0
        %867 = vmatpush1.msra.mxu0 %v799
        %868 = vmatprep.subr.mxu0 0.0
        %869 = vmatpush1.msra.mxu0 %v798
        %870 = vmatprep.subr.mxu0 0.0
        %871 = vmatpush1.msra.mxu0 %v797
        %872 = vmatprep.subr.mxu0 0.0
        %873 = vmatpush1.msra.mxu0 %v796
        %874 = vmatprep.subr.mxu0 0.0
        %875 = vmatpush1.msra.mxu0 %v795
        %876 = vmatprep.subr.mxu0 0.0
        %877 = vmatpush1.msra.mxu0 %v794
        %878 = vmatprep.subr.mxu0 0.0
        %879 = vmatpush1.msra.mxu0 %v793
        %880 = vmatprep.subr.mxu0 0.0
        %881 = vmatpush1.msra.mxu0 %v792
        %882 = vmatprep.subr.mxu0 0.0
        %883 = vmatpush1.msra.mxu0 %v791
        %884 = vmatprep.subr.mxu0 0.0
        %885 = vmatpush1.msra.mxu0 %v790
        %886 = vmatprep.subr.mxu0 0.0
        %887 = vmatpush2.msra.mxu0 %v821
        %888 = vmatprep.subr.mxu0 0.0
        %889 = vmatpush2.msra.mxu0 %v820
        %890 = vmatprep.subr.mxu0 0.0
        %891 = vmatpush2.msra.mxu0 %v819
        %892 = vmatprep.subr.mxu0 0.0
        %893 = vmatpush2.msra.mxu0 %v818
        %894 = vmatprep.subr.mxu0 0.0
        %895 = vmatpush2.msra.mxu0 %v817
        %896 = vmatprep.subr.mxu0 0.0
        %897 = vmatpush2.msra.mxu0 %v816
        %898 = vmatprep.subr.mxu0 0.0
        %899 = vmatpush2.msra.mxu0 %v815
        %900 = vmatprep.subr.mxu0 0.0
        %901 = vmatpush2.msra.mxu0 %v814
        %902 = vmatprep.subr.mxu0 0.0
        %903 = vmatpush2.msra.mxu0 %v813
        %904 = vmatprep.subr.mxu0 0.0
        %905 = vmatpush2.msra.mxu0 %v812
        %906 = vmatprep.subr.mxu0 0.0
        %907 = vmatpush2.msra.mxu0 %v811
        %908 = vmatprep.subr.mxu0 0.0
        %909 = vmatpush2.msra.mxu0 %v810
        %910 = vmatprep.subr.mxu0 0.0
        %911 = vmatpush2.msra.mxu0 %v809
        %912 = vmatprep.subr.mxu0 0.0
        %913 = vmatpush2.msra.mxu0 %v808
        %914 = vmatprep.subr.mxu0 0.0
        %915 = vmatpush2.msra.mxu0 %v807
        %916 = vmatprep.subr.mxu0 0.0
        %917 = vmatpush2.msra.mxu0 %v806
        %918 = vmatprep.mubr.f32.mxu0 %v180
        %919 = vmatmul.mubr.f32.gmra.mxu0 %v179
        %v920 = vpop.f32.mrf.mxu0
        %v921 = vadd.f32 0.0, %v920
        %v922 = vpop.f32.mrf.mxu0
        %923 = vmatprep.mubr.f32.mxu0 %v182
        %924 = vmatmul.mubr.f32.gmra.mxu0 %v181
        %v925 = vpop.f32.mrf.mxu0
        %v926 = vadd.f32 0.0, %v925
        %v927 = vpop.f32.mrf.mxu0
        %928 = vmatprep.mubr.f32.mxu0 %v184
        %929 = vmatmul.mubr.f32.gmra.mxu0 %v183
        %v930 = vpop.f32.mrf.mxu0
        %v931 = vadd.f32 0.0, %v930
        %v932 = vpop.f32.mrf.mxu0
        %933 = vmatprep.mubr.f32.mxu0 %v186
        %934 = vmatmul.mubr.f32.gmra.mxu0 %v185
        %v935 = vpop.f32.mrf.mxu0
        %v936 = vadd.f32 0.0, %v935
        %v937 = vpop.f32.mrf.mxu0
        %938 = vmatprep.mubr.f32.mxu0 %v188
        %939 = vmatmul.mubr.f32.gmra.mxu0 %v187
        %v940 = vpop.f32.mrf.mxu0
        %v941 = vadd.f32 0.0, %v940
        %v942 = vpop.f32.mrf.mxu0
        %943 = vmatprep.mubr.f32.mxu0 %v190
        %944 = vmatmul.mubr.f32.gmra.mxu0 %v189
        %v945 = vpop.f32.mrf.mxu0
        %v946 = vadd.f32 0.0, %v945
        %v947 = vpop.f32.mrf.mxu0
        %948 = vmatprep.mubr.f32.mxu0 %v192
        %949 = vmatmul.mubr.f32.gmra.mxu0 %v191
        %v950 = vpop.f32.mrf.mxu0
        %v951 = vadd.f32 0.0, %v950
        %v952 = vpop.f32.mrf.mxu0
        %953 = vmatprep.mubr.f32.mxu0 %v194
        %954 = vmatmul.mubr.f32.gmra.mxu0 %v193
        %v955 = vpop.f32.mrf.mxu0
        %v956 = vadd.f32 0.0, %v955
        %v957 = vpop.f32.mrf.mxu0
        %958 = vmatprep.mubr.f32.mxu0 %v196
        %959 = vmatmul.mubr.f32.gmra.mxu0 %v195
        %v960 = vpop.f32.mrf.mxu0
        %v961 = vadd.f32 0.0, %v960
        %v962 = vpop.f32.mrf.mxu0
        %963 = vmatprep.mubr.f32.mxu0 %v198
        %964 = vmatmul.mubr.f32.gmra.mxu0 %v197
        %v965 = vpop.f32.mrf.mxu0
        %v966 = vadd.f32 0.0, %v965
        %v967 = vpop.f32.mrf.mxu0
        %968 = vmatprep.mubr.f32.mxu0 %v200
        %969 = vmatmul.mubr.f32.gmra.mxu0 %v199
        %v970 = vpop.f32.mrf.mxu0
        %v971 = vadd.f32 0.0, %v970
        %v972 = vpop.f32.mrf.mxu0
        %973 = vmatprep.mubr.f32.mxu0 %v202
        %974 = vmatmul.mubr.f32.gmra.mxu0 %v201
        %v975 = vpop.f32.mrf.mxu0
        %v976 = vadd.f32 0.0, %v975
        %v977 = vpop.f32.mrf.mxu0
        %978 = vmatprep.mubr.f32.mxu0 %v204
        %979 = vmatmul.mubr.f32.gmra.mxu0 %v203
        %v980 = vpop.f32.mrf.mxu0
        %v981 = vadd.f32 0.0, %v980
        %v982 = vpop.f32.mrf.mxu0
        %983 = vmatprep.mubr.f32.mxu0 %v206
        %984 = vmatmul.mubr.f32.gmra.mxu0 %v205
        %v985 = vpop.f32.mrf.mxu0
        %v986 = vadd.f32 0.0, %v985
        %v987 = vpop.f32.mrf.mxu0
        %988 = vmatprep.mubr.f32.mxu0 %v208
        %989 = vmatmul.mubr.f32.gmra.mxu0 %v207
        %v990 = vpop.f32.mrf.mxu0
        %v991 = vadd.f32 0.0, %v990
        %v992 = vpop.f32.mrf.mxu0
        %993 = vmatprep.mubr.f32.mxu0 %v210
        %994 = vmatmul.mubr.f32.gmra.mxu0 %v209
        %v995 = vpop.f32.mrf.mxu0
        %v996 = vadd.f32 0.0, %v995
        %v997 = vpop.f32.mrf.mxu0
        %998 = vmatprep.mubr.f32.mxu0 %v212
        %999 = vmatmul.mubr.f32.gmra.mxu0 %v211
        %v1000 = vpop.f32.mrf.mxu0
        %v1001 = vadd.f32 0.0, %v1000
        %v1002 = vpop.f32.mrf.mxu0
        %1003 = vmatprep.mubr.f32.mxu0 %v214
        %1004 = vmatmul.mubr.f32.gmra.mxu0 %v213
        %v1005 = vpop.f32.mrf.mxu0
        %v1006 = vadd.f32 0.0, %v1005
        %v1007 = vpop.f32.mrf.mxu0
        %1008 = vmatprep.mubr.f32.mxu0 %v216
        %1009 = vmatmul.mubr.f32.gmra.mxu0 %v215
        %v1010 = vpop.f32.mrf.mxu0
        %v1011 = vadd.f32 0.0, %v1010
        %v1012 = vpop.f32.mrf.mxu0
        %1013 = vmatprep.mubr.f32.mxu0 %v218
        %1014 = vmatmul.mubr.f32.gmra.mxu0 %v217
        %v1015 = vpop.f32.mrf.mxu0
        %v1016 = vadd.f32 0.0, %v1015
        %v1017 = vpop.f32.mrf.mxu0
        %1018 = vmatprep.mubr.f32.mxu0 %v220
        %1019 = vmatmul.mubr.f32.gmra.mxu0 %v219
        %v1020 = vpop.f32.mrf.mxu0
        %v1021 = vadd.f32 0.0, %v1020
        %v1022 = vpop.f32.mrf.mxu0
        %1023 = vmatprep.mubr.f32.mxu0 %v222
        %1024 = vmatmul.mubr.f32.gmra.mxu0 %v221
        %v1025 = vpop.f32.mrf.mxu0
        %v1026 = vadd.f32 0.0, %v1025
        %v1027 = vpop.f32.mrf.mxu0
        %1028 = vmatprep.mubr.f32.mxu0 %v224
        %1029 = vmatmul.mubr.f32.gmra.mxu0 %v223
        %v1030 = vpop.f32.mrf.mxu0
        %v1031 = vadd.f32 0.0, %v1030
        %v1032 = vpop.f32.mrf.mxu0
        %1033 = vmatprep.mubr.f32.mxu0 %v226
        %1034 = vmatmul.mubr.f32.gmra.mxu0 %v225
        %v1035 = vpop.f32.mrf.mxu0
        %v1036 = vadd.f32 0.0, %v1035
        %v1037 = vpop.f32.mrf.mxu0
        %1038 = vmatprep.mubr.f32.mxu0 %v228
        %1039 = vmatmul.mubr.f32.gmra.mxu0 %v227
        %v1040 = vpop.f32.mrf.mxu0
        %v1041 = vadd.f32 0.0, %v1040
        %v1042 = vpop.f32.mrf.mxu0
        %1043 = vmatprep.mubr.f32.mxu0 %v230
        %1044 = vmatmul.mubr.f32.gmra.mxu0 %v229
        %v1045 = vpop.f32.mrf.mxu0
        %v1046 = vadd.f32 0.0, %v1045
        %v1047 = vpop.f32.mrf.mxu0
        %1048 = vmatprep.mubr.f32.mxu0 %v232
        %1049 = vmatmul.mubr.f32.gmra.mxu0 %v231
        %v1050 = vpop.f32.mrf.mxu0
        %v1051 = vadd.f32 0.0, %v1050
        %v1052 = vpop.f32.mrf.mxu0
        %1053 = vmatprep.mubr.f32.mxu0 %v234
        %1054 = vmatmul.mubr.f32.gmra.mxu0 %v233
        %v1055 = vpop.f32.mrf.mxu0
        %v1056 = vadd.f32 0.0, %v1055
        %v1057 = vpop.f32.mrf.mxu0
        %1058 = vmatprep.mubr.f32.mxu0 %v236
        %1059 = vmatmul.mubr.f32.gmra.mxu0 %v235
        %v1060 = vpop.f32.mrf.mxu0
        %v1061 = vadd.f32 0.0, %v1060
        %v1062 = vpop.f32.mrf.mxu0
        %1063 = vmatprep.mubr.f32.mxu0 %v238
        %1064 = vmatmul.mubr.f32.gmra.mxu0 %v237
        %v1065 = vpop.f32.mrf.mxu0
        %v1066 = vadd.f32 0.0, %v1065
        %v1067 = vpop.f32.mrf.mxu0
        %1068 = vmatprep.mubr.f32.mxu0 %v240
        %1069 = vmatmul.mubr.f32.gmra.mxu0 %v239
        %v1070 = vpop.f32.mrf.mxu0
        %v1071 = vadd.f32 0.0, %v1070
        %v1072 = vpop.f32.mrf.mxu0
        %1073 = vmatprep.mubr.f32.mxu0 %v242
        %1074 = vmatmul.mubr.f32.gmra.mxu0 %v241
        %v1075 = vpop.f32.mrf.mxu0
        %v1076 = vadd.f32 0.0, %v1075
        %v1077 = vpop.f32.mrf.mxu0
        %1078 = vdwg.mxu0
        %v1079 = vmul.f32 %v500, %v921
        %v1080 = vmul.f32 %v500, %v926
        %v1081 = vmul.f32 %v500, %v931
        %v1082 = vmul.f32 %v500, %v936
        %v1083 = vmul.f32 %v500, %v941
        %v1084 = vmul.f32 %v500, %v946
        %v1085 = vmul.f32 %v500, %v951
        %v1086 = vmul.f32 %v500, %v956
        %v1087 = vmul.f32 %v500, %v961
        %v1088 = vmul.f32 %v500, %v966
        %v1089 = vmul.f32 %v500, %v971
        %v1090 = vmul.f32 %v500, %v976
        %v1091 = vmul.f32 %v500, %v981
        %v1092 = vmul.f32 %v500, %v986
        %v1093 = vmul.f32 %v500, %v991
        %v1094 = vmul.f32 %v500, %v996
        %v1095 = vmul.f32 %v500, %v1001
        %v1096 = vmul.f32 %v500, %v1006
        %v1097 = vmul.f32 %v500, %v1011
        %v1098 = vmul.f32 %v500, %v1016
        %v1099 = vmul.f32 %v500, %v1021
        %v1100 = vmul.f32 %v500, %v1026
        %v1101 = vmul.f32 %v500, %v1031
        %v1102 = vmul.f32 %v500, %v1036
        %v1103 = vmul.f32 %v500, %v1041
        %v1104 = vmul.f32 %v500, %v1046
        %v1105 = vmul.f32 %v500, %v1051
        %v1106 = vmul.f32 %v500, %v1056
        %v1107 = vmul.f32 %v500, %v1061
        %v1108 = vmul.f32 %v500, %v1066
        %v1109 = vmul.f32 %v500, %v1071
        %v1110 = vmul.f32 %v500, %v1076
        %v1111 = vadd.f32 %v822, %v1079
        %v1112 = vadd.f32 %v823, %v1080
        %v1113 = vadd.f32 %v824, %v1081
        %v1114 = vadd.f32 %v825, %v1082
        %v1115 = vadd.f32 %v826, %v1083
        %v1116 = vadd.f32 %v827, %v1084
        %v1117 = vadd.f32 %v828, %v1085
        %v1118 = vadd.f32 %v829, %v1086
        %v1119 = vadd.f32 %v830, %v1087
        %v1120 = vadd.f32 %v831, %v1088
        %v1121 = vadd.f32 %v832, %v1089
        %v1122 = vadd.f32 %v833, %v1090
        %v1123 = vadd.f32 %v834, %v1091
        %v1124 = vadd.f32 %v835, %v1092
        %v1125 = vadd.f32 %v836, %v1093
        %v1126 = vadd.f32 %v837, %v1094
        %v1127 = vadd.f32 %v838, %v1095
        %v1128 = vadd.f32 %v839, %v1096
        %v1129 = vadd.f32 %v840, %v1097
        %v1130 = vadd.f32 %v841, %v1098
        %v1131 = vadd.f32 %v842, %v1099
        %v1132 = vadd.f32 %v843, %v1100
        %v1133 = vadd.f32 %v844, %v1101
        %v1134 = vadd.f32 %v845, %v1102
        %v1135 = vadd.f32 %v846, %v1103
        %v1136 = vadd.f32 %v847, %v1104
        %v1137 = vadd.f32 %v848, %v1105
        %v1138 = vadd.f32 %v849, %v1106
        %v1139 = vadd.f32 %v850, %v1107
        %v1140 = vadd.f32 %v851, %v1108
        %v1141 = vadd.f32 %v852, %v1109
        %v1142 = vadd.f32 %v853, %v1110
        %1143 = vst [vmem:[%s177] sm:$0xff] %v1111
        %1144 = vst [vmem:[%s177 + $0x8] sm:$0xff] %v1112
        %1145 = vst [vmem:[%s177 + $0x10] sm:$0xff] %v1113
        %1146 = vst [vmem:[%s177 + $0x18] sm:$0xff] %v1114
        %1147 = vst [vmem:[%s177 + $0x20] sm:$0xff] %v1115
        %1148 = vst [vmem:[%s177 + $0x28] sm:$0xff] %v1116
        %1149 = vst [vmem:[%s177 + $0x30] sm:$0xff] %v1117
        %1150 = vst [vmem:[%s177 + $0x38] sm:$0xff] %v1118
        %1151 = vst [vmem:[%s177 + $0x40] sm:$0xff] %v1119
        %1152 = vst [vmem:[%s177 + $0x48] sm:$0xff] %v1120
        %1153 = vst [vmem:[%s177 + $0x50] sm:$0xff] %v1121
        %1154 = vst [vmem:[%s177 + $0x58] sm:$0xff] %v1122
        %1155 = vst [vmem:[%s177 + $0x60] sm:$0xff] %v1123
        %1156 = vst [vmem:[%s177 + $0x68] sm:$0xff] %v1124
        %1157 = vst [vmem:[%s177 + $0x70] sm:$0xff] %v1125
        %1158 = vst [vmem:[%s177 + $0x78] sm:$0xff] %v1126
        %1159 = vst [vmem:[%s177 + $0x80] sm:$0xff] %v1127
        %1160 = vst [vmem:[%s177 + $0x88] sm:$0xff] %v1128
        %1161 = vst [vmem:[%s177 + $0x90] sm:$0xff] %v1129
        %1162 = vst [vmem:[%s177 + $0x98] sm:$0xff] %v1130
        %1163 = vst [vmem:[%s177 + $0xa0] sm:$0xff] %v1131
        %1164 = vst [vmem:[%s177 + $0xa8] sm:$0xff] %v1132
        %1165 = vst [vmem:[%s177 + $0xb0] sm:$0xff] %v1133
        %1166 = vst [vmem:[%s177 + $0xb8] sm:$0xff] %v1134
        %1167 = vst [vmem:[%s177 + $0xc0] sm:$0xff] %v1135
        %1168 = vst [vmem:[%s177 + $0xc8] sm:$0xff] %v1136
        %1169 = vst [vmem:[%s177 + $0xd0] sm:$0xff] %v1137
        %1170 = vst [vmem:[%s177 + $0xd8] sm:$0xff] %v1138
        %1171 = vst [vmem:[%s177 + $0xe0] sm:$0xff] %v1139
        %1172 = vst [vmem:[%s177 + $0xe8] sm:$0xff] %v1140
        %1173 = vst [vmem:[%s177 + $0xf0] sm:$0xff] %v1141
        %1174 = vst [vmem:[%s177 + $0xf8] sm:$0xff] %v1142
        %s1175 = sand.u32 %s77, 1
        %s1176 = scalar_lea.sflag [#allocation6], %s1175
        %s1177 = sand.u32 %s77, 1
        %s1178 = smul.addr %s1177, 256
        %s1179 = scalar_lea.vmem [#allocation9], %s1178
        // Predicated region
        $region37: #{tpu_custom_call.1} parent=27 // pred_check
          %p1180 = pneg %p87
        $region38: #{tpu_custom_call.1} parent=27 // pred_check_branch
          %1182 = sbr.rel (%p1180) target = $region40
        $region39: #{tpu_custom_call.1} parent=27 // pred_region
          %s1184 = ssub.s32 4096, 4096
          %1185 = vsyncadd %s1176, %s1184
          %s1186 = smul.addr %s22, 128
          %s1187 = scalar_lea.hbm %s3, %s1186
          %s1188 = sshll.u32 %s1179, 4
          %s1189 = int_to_ptr.vmem [resolvable:$true] %s1188
          %1194 = dma.vmem_to_hbm [thread:$0]  %s1189, 4096, %s1187, %s1176, 128, 512, 8
        $region40: #{tpu_custom_call.1} parent=27 // pred_fallthru
          _
      $region28: #{tpu_custom_call.1} parent=5 // pred_fallthru
        _
      %p1195 = scmp.le.s32.totalorder 2, %s17
      // Predicated region
      $region41: #{tpu_custom_call.1} parent=5 // pred_check
        %p1196 = pneg %p1195
      $region42: #{tpu_custom_call.1} parent=5 // pred_check_branch
        %1198 = sbr.rel (%p1196) target = $region44
      $region43: #{tpu_custom_call.1} parent=5 // pred_region
        %s1199 = ssub.s32 %s17, 2
        // Predicated region
        $region45: #{tpu_custom_call.1} parent=43 // pred_check
          %p1200 = pneg %p93
        $region46: #{tpu_custom_call.1} parent=43 // pred_check_branch
          %1202 = sbr.rel (%p1200) target = $region48
        $region47: #{tpu_custom_call.1} parent=43 // pred_region
          %s1203 = sand.u32 %s78, 1
          %s1204 = scalar_lea.sflag [#allocation6], %s1203
          %s1205 = sand.u32 %s78, 1
          %s1206 = smul.addr %s1205, 256
          %s1207 = scalar_lea.vmem [#allocation9], %s1206
          %1208 = dma.done %s1204, 4096
        $region48: #{tpu_custom_call.1} parent=43 // pred_fallthru
          _
      $region44: #{tpu_custom_call.1} parent=5 // pred_fallthru
        _
    $region6: #{tpu_custom_call.1} parent=1 // loop_footer
      %s21 = sadd.s32 1, %s17
    $region7: #{tpu_custom_call.1} parent=1 // loop_footer_branch
      %16 = sbr.rel target = $region3
    $region8: #{tpu_custom_call.1} parent=1 // loop_exit
      _
    %1209 = vsyncpa [#allocation5], 1
    %s1210 = scalar_lea.sflag [#allocation5], 1
    %1211 = vsyncpa %s1210, 1
    %1212 = vsyncpa [#allocation8], 1
    %s1213 = scalar_lea.sflag [#allocation8], 1
    %1214 = vsyncpa %s1213, 1
    %1215 = vsyncpa [#allocation6], 1
    %s1216 = scalar_lea.sflag [#allocation6], 1
    %1217 = vsyncpa %s1216, 1

</llo_original>
